<compile_context>
chip_gen: v6e
topology: v6e:2x2x1
jax: 0.10.0
libtpu: 0.0.40
codegen_flags: <defaults>
</compile_context>

<pallas_src>
import functools
import math

import jax
import jax.numpy as jnp
import numpy as np
from jax.experimental import pallas as pl
from jax.experimental.pallas import tpu as pltpu

EPS = 1e-5                        # torch.nn.LayerNorm default eps
_INV_SQRT2 = np.float32(1.0 / math.sqrt(2.0))


def _layernorm(x, g, b):
    mu = jnp.mean(x, axis=-1, keepdims=True)
    var = jnp.mean(jnp.square(x - mu), axis=-1, keepdims=True)
    return (x - mu) * jax.lax.rsqrt(var + EPS) * g + b


def _gelu_exact(x):               # nn.GELU default (erf form)
    return 0.5 * x * (1.0 + jax.lax.erf(x * _INV_SQRT2))


def _pick_image_block(batch, max_images):
    """Largest divisor of `batch` <= max_images, preferring >= 2 grid steps (megacore)."""
    divs = [c for c in range(1, batch + 1) if batch % c == 0 and c <= max_images]
    pref = [c for c in divs if batch // c >= 2]
    return max(pref) if pref else max(divs)


def _pick_vmem_limit_bytes():
    """Generation-aware VMEM budget with a safe fallback (fits v7x's 64 MiB physical)."""
    cap = None
    try:
        info = pltpu.get_tpu_info()
        for name in ("vmem_capacity_bytes", "vmem_size_bytes", "vmem_bytes"):
            if hasattr(info, name):
                cap = int(getattr(info, name))
                break
    except Exception:
        cap = None
    if not cap or cap <= 0:
        cap = 64 * 1024 * 1024
    return min((cap * 7) // 8, 112 * 1024 * 1024)


# ------------------------------ fused kernel --------------------------------

def vit_blocks_kernel(patches_ref, wconv_ref, pos_ref, lnpre_ref,
                      small_ref, wqkv_ref, wo_ref, wfc_ref, bfc_ref, wpr_ref,
                      lnpost_ref, proj_ref,
                      out_ref, x_sc,
                      *, num_heads, n_valid, bblk, approx_recip):
    # grid = (batch_group, layer); tokens for bblk images live in x_sc (f32) across layers.
    layer = pl.program_id(1)
    n1p, d = pos_ref.shape
    m = bblk * n1p
    hd = d // num_heads
    cdt = wqkv_ref.dtype                           # MXU input dtype (bf16)
    scale = np.float32(1.0 / math.sqrt(hd))

    # ---- layer 0 prologue: patch matmul + (cls-folded) positional embed + ln_pre ----
    @pl.when(layer == 0)
    def _():
        p_flat = patches_ref[...].reshape(m, patches_ref.shape[-1])
        x0 = jnp.dot(p_flat, wconv_ref[...], preferred_element_type=jnp.float32)
        x0 = (x0.reshape(bblk, n1p, d) + pos_ref[...]).reshape(m, d)
        x_sc[...] = _layernorm(x0, lnpre_ref[0:1, :], lnpre_ref[1:2, :])

    x = x_sc[...]                                  # [M, D] f32, resident across the layer axis
    small = small_ref[0]                           # [9, D]: ln1g, ln1b, ln2g, ln2b, bq, bk, bv, bo, bpr

    # ---- attention: ln_1 -> fused QKV -> per-head SDPA -> per-head out-proj accumulate ----
    xl = _layernorm(x, small[0:1], small[1:2]).astype(cdt)
    qkv = jnp.dot(xl, wqkv_ref[0], preferred_element_type=jnp.float32)     # [M, 3D] f32
    q = qkv[:, 0:d].reshape(bblk, n1p, d) + small[4:5]
    k = qkv[:, d:2 * d].reshape(bblk, n1p, d) + small[5:6]
    v = (qkv[:, 2 * d:3 * d].reshape(bblk, n1p, d) + small[6:7]).astype(cdt)

    if n_valid < n1p:                              # mask padded key columns (static shapes)
        col = jax.lax.broadcasted_iota(jnp.int32, (1, 1, n1p), 2)
        key_bias = jnp.where(col < n_valid, 0.0, -1e30).astype(jnp.float32)
    else:
        key_bias = None

    acc = x + small[7:8]                           # residual + out-proj bias (added once)
    for h in range(num_heads):                     # static head loop: small score/PV matmuls
        lo = h * hd
        qh = q[:, :, lo:lo + hd].astype(cdt)
        kh = k[:, :, lo:lo + hd].astype(cdt)
        vh = v[:, :, lo:lo + hd]
        s = jnp.einsum('bqd,bkd->bqk', qh, kh,
                       preferred_element_type=jnp.float32) * scale
        if key_bias is not None:
            s = s + key_bias
        s = s - jnp.max(s, axis=-1, keepdims=True)
        p = jnp.exp(s)
        p = p * pl.reciprocal(jnp.sum(p, axis=-1, keepdims=True), approx=approx_recip)
        ctx = jnp.einsum('bqk,bkd->bqd', p.astype(cdt), vh,
                         preferred_element_type=jnp.float32)
        # per-head slice of the out-projection (wo repacked [H, hd, D]); accumulate in f32
        acc = acc + jnp.dot(ctx.reshape(m, hd).astype(cdt), wo_ref[0, h],
                            preferred_element_type=jnp.float32)
    x = acc                                        # ln_attn = Identity

    # ---- MLP: ln_2 -> c_fc -> GELU -> c_proj -> residual ----
    x2 = _layernorm(x, small[2:3], small[3:4]).astype(cdt)
    hmid = jnp.dot(x2, wfc_ref[0], preferred_element_type=jnp.float32) + bfc_ref[0]
    hmid = _gelu_exact(hmid).astype(cdt)
    x = x + (jnp.dot(hmid, wpr_ref[0], preferred_element_type=jnp.float32) + small[8:9])
    x_sc[...] = x

    # ---- last-layer epilogue: ln_post on CLS row of each image + output projection ----
    @pl.when(layer == pl.num_programs(1) - 1)
    def _():
        rows = [x[b * n1p:b * n1p + 1, :] for b in range(bblk)]
        cls = rows[0] if bblk == 1 else jnp.concatenate(rows, axis=0)      # [bblk, D]
        cls = _layernorm(cls, lnpost_ref[0:1, :], lnpost_ref[1:2, :])
        out_ref[0] = jnp.dot(cls.astype(proj_ref.dtype), proj_ref[...],
                             preferred_element_type=jnp.float32)


# ------------------------------ wrapper --------------------------------------

class VisualTransformerPallas:
    def __init__(self, image_size, patch_size, width, layers, heads, mlp_ratio,
                 output_dim, key, param_dtype=jnp.bfloat16,
                 max_images_per_step=4, approx_softmax=True):
        assert width % heads == 0
        self.patch_size = patch_size
        self.width = width
        self.layers = layers
        self.heads = heads
        self.head_dim = width // heads
        self.mlp_width = int(width * mlp_ratio)
        self.output_dim = output_dim
        self.grid_size = image_size // patch_size
        self.num_patches = self.grid_size * self.grid_size
        self.num_tokens = self.num_patches + 1
        self.num_tokens_padded = ((self.num_tokens + 7) // 8) * 8      # sublane-align tokens
        self.patch_dim = 3 * patch_size * patch_size
        self.param_dtype = param_dtype
        self.max_images_per_step = max_images_per_step
        self.approx_softmax = approx_softmax
        self.vmem_limit_bytes = _pick_vmem_limit_bytes()
        # TODO(synk): for D>=1024 models on v7x (64 MiB VMEM) split the layer step into
        # attention / MLP weight phases (extra grid sub-axis) so both slabs are not live
        # double-buffered; not needed at these shapes.

        D, F, P, L, H = width, self.mlp_width, self.patch_dim, layers, heads
        hd = self.head_dim
        scale = width ** -0.5
        keys = iter(jax.random.split(key, 4 + 8 * layers))

        def nrm(shape, s):
            return (s * jax.random.normal(next(keys), shape)).astype(jnp.float32)

        ones = jnp.ones((D,), jnp.float32)
        zeros = jnp.zeros((D,), jnp.float32)

        # conv1 weight [D, 3, p, p] flattened over (c, kh, kw) -> [P, D]
        self.wconv = jnp.transpose(nrm((D, P), 0.02)).astype(param_dtype)
        cls = nrm((D,), scale)                        # class_embedding
        pos = nrm((self.num_tokens, D), scale)        # positional_embedding
        pos_full = jnp.zeros((self.num_tokens_padded, D), jnp.float32)
        pos_full = pos_full.at[0].set(pos[0] + cls)   # fold CLS token into pos row 0
        pos_full = pos_full.at[1:self.num_tokens].set(pos[1:])
        self.pos_full = pos_full
        self.ln_pre = jnp.stack([ones, zeros])        # [2, D]

        small_l, wqkv_l, wo_l, wfc_l, bfc_l, wpr_l = [], [], [], [], [], []
        for _ in range(layers):
            in_w = nrm((3 * D, D), 0.02)              # in_proj_weight (q;k;v)
            in_b = nrm((3 * D,), 0.02)
            out_w = nrm((D, D), 0.02)
            out_b = nrm((D,), 0.02)
            fc_w = nrm((F, D), 0.02)
            fc_b = nrm((F,), 0.02)
            pr_w = nrm((D, F), 0.02)
            pr_b = nrm((D,), 0.02)

            small_l.append(jnp.stack([ones, zeros, ones, zeros,        # ln1 g/b, ln2 g/b
                                      in_b[0:D], in_b[D:2 * D], in_b[2 * D:3 * D],
                                      out_b, pr_b]))                   # [9, D]
            wqkv_l.append(in_w.T)                                      # [D, 3D]
            wo_l.append(out_w.T.reshape(H, hd, D))                     # [H, hd, D]
            wfc_l.append(fc_w.T)                                       # [D, F]
            bfc_l.append(fc_b.reshape(1, F))
            wpr_l.append(pr_w.T)                                       # [F, D]

        self.small = jnp.stack(small_l)                                # [L, 9, D] f32
        self.wqkv = jnp.stack(wqkv_l).astype(param_dtype)              # [L, D, 3D] bf16
        self.wo = jnp.stack(wo_l).astype(param_dtype)                  # [L, H, hd, D] bf16
        self.wfc = jnp.stack(wfc_l).astype(param_dtype)                # [L, D, F] bf16
        self.bfc = jnp.stack(bfc_l)                                    # [L, 1, F] f32
        self.wpr = jnp.stack(wpr_l).astype(param_dtype)                # [L, F, D] bf16

        self.ln_post = jnp.stack([ones, zeros])                        # [2, D]
        self.proj = nrm((D, output_dim), scale).astype(param_dtype)    # [D, OD]

    def __call__(self, x):
        B, C, Himg, Wimg = x.shape
        p = self.patch_size
        gh, gw = Himg // p, Wimg // p
        N = gh * gw
        assert N + 1 == self.num_tokens
        # TODO(synk): bicubic positional-embedding interpolation (num_imgtoken != num_postoken)
        # is not implemented; it never triggers when image/patch sizes match the config.
        N1p, D, P, F = self.num_tokens_padded, self.width, self.patch_dim, self.mlp_width
        L, H, OD, hd = self.layers, self.heads, self.output_dim, self.head_dim
        pdt = self.param_dtype

        bblk = _pick_image_block(B, self.max_images_per_step)
        bg = B // bblk

        # --- glue: extract non-overlapping patches in (c, kh, kw) order, pad token axis ---
        patches = x.reshape(B, C, gh, p, gw, p)
        patches = patches.transpose(0, 2, 4, 1, 3, 5).reshape(B, N, P).astype(pdt)
        patches = jnp.concatenate(
            [jnp.zeros((B, 1, P), pdt), patches,
             jnp.zeros((B, N1p - N - 1, P), pdt)], axis=1)             # [B, N1p, P]

        def lspec(shape):        # per-layer stacked weight slab, streamed over the layer axis
            z = (0,) * len(shape)
            return pl.BlockSpec((1,) + shape, lambda g, l, _z=z: (l,) + _z)

        def cspec(shape):        # grid-invariant (resident) params
            z = (0,) * len(shape)
            return pl.BlockSpec(shape, lambda g, l, _z=z: _z)

        kern = functools.partial(vit_blocks_kernel, num_heads=H,
                                 n_valid=self.num_tokens, bblk=bblk,
                                 approx_recip=self.approx_softmax)
        out = pl.pallas_call(
            kern,
            grid=(bg, L),
            in_specs=[pl.BlockSpec((bblk, N1p, P), lambda g, l: (g, 0, 0)),  # patches
                      cspec((P, D)),            # conv1 weight (resident)
                      cspec((N1p, D)),          # positional embed (+cls), resident
                      cspec((2, D)),            # ln_pre g,b (resident)
                      lspec((9, D)),            # ln1/ln2 g,b + bq,bk,bv,bo,bpr
                      lspec((D, 3 * D)),        # fused QKV weight
                      lspec((H, hd, D)),        # out-proj weight, per-head packed
                      lspec((D, F)),            # c_fc weight
                      lspec((1, F)),            # c_fc bias
                      lspec((F, D)),            # c_proj weight
                      cspec((2, D)),            # ln_post g,b (resident)
                      cspec((D, OD))],          # output projection (resident)
            out_specs=pl.BlockSpec((1, bblk, OD), lambda g, l: (g, 0, 0)),
            out_shape=jax.ShapeDtypeStruct((bg, bblk, OD), jnp.float32),
            scratch_shapes=[pltpu.VMEM((bblk * N1p, D), jnp.float32)],   # resident tokens
            compiler_params=pltpu.CompilerParams(
                dimension_semantics=("parallel", "arbitrary"),
                vmem_limit_bytes=self.vmem_limit_bytes),
        )(patches, self.wconv, self.pos_full, self.ln_pre,
          self.small, self.wqkv, self.wo, self.wfc, self.bfc, self.wpr,
          self.ln_post, self.proj)
        return out.reshape(B, OD)


if __name__ == "__main__":
    key = jax.random.PRNGKey(0)
    model = VisualTransformerPallas(
        image_size=16, patch_size=4, width=32, layers=2, heads=4,
        mlp_ratio=4.0, output_dim=16, key=key)
    x = jax.random.normal(jax.random.fold_in(key, 123), (2, 3, 16, 16), jnp.float32)
    out = jax.block_until_ready(model(x))
    assert out.shape == (2, 16) and out.dtype == jnp.float32
    assert bool(jnp.all(jnp.isfinite(out)))
    print("KERNEL_OK")
</pallas_src>

<mosaic_0001>
module attributes {stable_mosaic.version = 11 : i64} {
  func.func @vit_blocks_kernel(%arg0: i32, %arg1: i32, %arg2: memref<1x24x48xbf16, #tpu.memory_space<vmem>>, %arg3: memref<48x32xbf16, #tpu.memory_space<vmem>>, %arg4: memref<24x32xf32, #tpu.memory_space<vmem>>, %arg5: memref<2x32xf32, #tpu.memory_space<vmem>>, %arg6: memref<1x9x32xf32, #tpu.memory_space<vmem>>, %arg7: memref<1x32x96xbf16, #tpu.memory_space<vmem>>, %arg8: memref<1x4x8x32xbf16, #tpu.memory_space<vmem>>, %arg9: memref<1x32x128xbf16, #tpu.memory_space<vmem>>, %arg10: memref<1x1x128xf32, #tpu.memory_space<vmem>>, %arg11: memref<1x128x32xbf16, #tpu.memory_space<vmem>>, %arg12: memref<2x32xf32, #tpu.memory_space<vmem>>, %arg13: memref<32x16xbf16, #tpu.memory_space<vmem>>, %arg14: memref<1x1x16xf32, #tpu.memory_space<vmem>>, %arg15: memref<24x32xf32, #tpu.memory_space<vmem>>) attributes {dimension_semantics = [#tpu.dimension_semantics<parallel>, #tpu.dimension_semantics<arbitrary>], iteration_bounds = array<i64: 2, 2>, scalar_prefetch = 0 : i64, scratch_operands = 1 : i64, tpu.core_type = #tpu.core_type<tc>, window_params = [{transform_indices = @transform_0, window_bounds = array<i64: 1, 24, 48>}, {pipeline_mode = #tpu.pipeline_mode<synchronous>, transform_indices = @transform_1, window_bounds = array<i64: 48, 32>}, {pipeline_mode = #tpu.pipeline_mode<synchronous>, transform_indices = @transform_2, window_bounds = array<i64: 24, 32>}, {pipeline_mode = #tpu.pipeline_mode<synchronous>, transform_indices = @transform_3, window_bounds = array<i64: 2, 32>}, {transform_indices = @transform_4, window_bounds = array<i64: 1, 9, 32>}, {transform_indices = @transform_5, window_bounds = array<i64: 1, 32, 96>}, {transform_indices = @transform_6, window_bounds = array<i64: 1, 4, 8, 32>}, {transform_indices = @transform_7, window_bounds = array<i64: 1, 32, 128>}, {transform_indices = @transform_8, window_bounds = array<i64: 1, 1, 128>}, {transform_indices = @transform_9, window_bounds = array<i64: 1, 128, 32>}, {pipeline_mode = #tpu.pipeline_mode<synchronous>, transform_indices = @transform_10, window_bounds = array<i64: 2, 32>}, {pipeline_mode = #tpu.pipeline_mode<synchronous>, transform_indices = @transform_11, window_bounds = array<i64: 32, 16>}, {transform_indices = @transform_12, window_bounds = array<i64: 1, 1, 16>}]} {
    %c0_i32 = arith.constant 0 : i32
    %0 = arith.cmpi eq, %arg1, %c0_i32 : i32
    %1 = arith.extui %0 : i1 to i32
    %c0_i32_0 = arith.constant 0 : i32
    %2 = arith.cmpi ne, %1, %c0_i32_0 : i32
    scf.if %2 {
      %c0_74 = arith.constant 0 : index
      %c0_75 = arith.constant 0 : index
      %c0_76 = arith.constant 0 : index
      %226 = vector.load %arg2[%c0_74, %c0_75, %c0_76] : memref<1x24x48xbf16, #tpu.memory_space<vmem>>, vector<1x24x48xbf16>
      %227 = vector.shape_cast %226 : vector<1x24x48xbf16> to vector<24x48xbf16>
      %c0_77 = arith.constant 0 : index
      %c0_78 = arith.constant 0 : index
      %228 = vector.load %arg3[%c0_77, %c0_78] : memref<48x32xbf16, #tpu.memory_space<vmem>>, vector<48x32xbf16>
      %cst_79 = arith.constant dense<0.000000e+00> : vector<24x32xf32>
      %229 = tpu.matmul %227, %228, %cst_79 {dimension_numbers = #tpu.dot_dimension_numbers<[1], [0], [0], [1], [0, 0, 1, 1], [], []>} : vector<24x48xbf16>, vector<48x32xbf16>, vector<24x32xf32> -> vector<24x32xf32>
      %230 = vector.shape_cast %229 : vector<24x32xf32> to vector<1x24x32xf32>
      %c0_80 = arith.constant 0 : index
      %c0_81 = arith.constant 0 : index
      %231 = vector.load %arg4[%c0_80, %c0_81] : memref<24x32xf32, #tpu.memory_space<vmem>>, vector<24x32xf32>
      %232 = vector.shape_cast %231 : vector<24x32xf32> to vector<1x24x32xf32>
      %233 = arith.addf %230, %232 : vector<1x24x32xf32>
      %234 = vector.shape_cast %233 : vector<1x24x32xf32> to vector<24x32xf32>
      %c0_82 = arith.constant 0 : index
      %c0_83 = arith.constant 0 : index
      %235 = vector.load %arg5[%c0_82, %c0_83] : memref<2x32xf32, #tpu.memory_space<vmem>>, vector<1x32xf32>
      %c1_84 = arith.constant 1 : index
      %c0_85 = arith.constant 0 : index
      %236 = vector.load %arg5[%c1_84, %c0_85] : memref<2x32xf32, #tpu.memory_space<vmem>>, vector<1x32xf32>
      %cst_86 = arith.constant dense<0.000000e+00> : vector<24xf32>
      %237 = vector.multi_reduction <add>, %234, %cst_86 [1] : vector<24x32xf32> to vector<24xf32>
      %238 = vector.shape_cast %237 : vector<24xf32> to vector<24x1xf32>
      %cst_87 = arith.constant 3.200000e+01 : f32
      %239 = vector.broadcast %cst_87 : f32 to vector<24x1xf32>
      %240 = arith.divf %238, %239 : vector<24x1xf32>
      %241 = vector.broadcast %240 : vector<24x1xf32> to vector<24x32xf32>
      %242 = arith.subf %234, %241 : vector<24x32xf32>
      %243 = arith.mulf %242, %242 : vector<24x32xf32>
      %cst_88 = arith.constant dense<0.000000e+00> : vector<24xf32>
      %244 = vector.multi_reduction <add>, %243, %cst_88 [1] : vector<24x32xf32> to vector<24xf32>
      %245 = vector.shape_cast %244 : vector<24xf32> to vector<24x1xf32>
      %cst_89 = arith.constant 3.200000e+01 : f32
      %246 = vector.broadcast %cst_89 : f32 to vector<24x1xf32>
      %247 = arith.divf %245, %246 : vector<24x1xf32>
      %248 = vector.broadcast %240 : vector<24x1xf32> to vector<24x32xf32>
      %249 = arith.subf %234, %248 : vector<24x32xf32>
      %cst_90 = arith.constant 9.99999974E-6 : f32
      %250 = vector.broadcast %cst_90 : f32 to vector<24x1xf32>
      %251 = arith.addf %247, %250 : vector<24x1xf32>
      %252 = math.rsqrt %251 : vector<24x1xf32>
      %253 = vector.broadcast %252 : vector<24x1xf32> to vector<24x32xf32>
      %254 = arith.mulf %249, %253 : vector<24x32xf32>
      %255 = vector.broadcast %235 : vector<1x32xf32> to vector<24x32xf32>
      %256 = arith.mulf %254, %255 : vector<24x32xf32>
      %257 = vector.broadcast %236 : vector<1x32xf32> to vector<24x32xf32>
      %258 = arith.addf %256, %257 : vector<24x32xf32>
      %c0_91 = arith.constant 0 : index
      %c0_92 = arith.constant 0 : index
      %259 = vector.load %arg15[%c0_91, %c0_92] : memref<24x32xf32, #tpu.memory_space<vmem>>, vector<24x32xf32>
      tpu.vector_store %arg15[%c0_91, %c0_92], %258 {strides = array<i32>} : memref<24x32xf32, #tpu.memory_space<vmem>>, vector<24x32xf32>,
    } else {
    }
    %c0 = arith.constant 0 : index
    %c0_1 = arith.constant 0 : index
    %3 = vector.load %arg15[%c0, %c0_1] : memref<24x32xf32, #tpu.memory_space<vmem>>, vector<24x32xf32>
    %c0_2 = arith.constant 0 : index
    %c0_3 = arith.constant 0 : index
    %c0_4 = arith.constant 0 : index
    %4 = vector.load %arg6[%c0_2, %c0_3, %c0_4] : memref<1x9x32xf32, #tpu.memory_space<vmem>>, vector<1x9x32xf32>
    %5 = vector.shape_cast %4 : vector<1x9x32xf32> to vector<9x32xf32>
    %6 = vector.extract_strided_slice %5 {offsets = [0, 0], sizes = [1, 32], strides = [1, 1]} : vector<9x32xf32> to vector<1x32xf32>
    %7 = vector.extract_strided_slice %5 {offsets = [1, 0], sizes = [1, 32], strides = [1, 1]} : vector<9x32xf32> to vector<1x32xf32>
    %cst = arith.constant dense<0.000000e+00> : vector<24xf32>
    %8 = vector.multi_reduction <add>, %3, %cst [1] : vector<24x32xf32> to vector<24xf32>
    %9 = vector.shape_cast %8 : vector<24xf32> to vector<24x1xf32>
    %cst_5 = arith.constant 3.200000e+01 : f32
    %10 = vector.broadcast %cst_5 : f32 to vector<24x1xf32>
    %11 = arith.divf %9, %10 : vector<24x1xf32>
    %12 = vector.broadcast %11 : vector<24x1xf32> to vector<24x32xf32>
    %13 = arith.subf %3, %12 : vector<24x32xf32>
    %14 = arith.mulf %13, %13 : vector<24x32xf32>
    %cst_6 = arith.constant dense<0.000000e+00> : vector<24xf32>
    %15 = vector.multi_reduction <add>, %14, %cst_6 [1] : vector<24x32xf32> to vector<24xf32>
    %16 = vector.shape_cast %15 : vector<24xf32> to vector<24x1xf32>
    %cst_7 = arith.constant 3.200000e+01 : f32
    %17 = vector.broadcast %cst_7 : f32 to vector<24x1xf32>
    %18 = arith.divf %16, %17 : vector<24x1xf32>
    %19 = vector.broadcast %11 : vector<24x1xf32> to vector<24x32xf32>
    %20 = arith.subf %3, %19 : vector<24x32xf32>
    %cst_8 = arith.constant 9.99999974E-6 : f32
    %21 = vector.broadcast %cst_8 : f32 to vector<24x1xf32>
    %22 = arith.addf %18, %21 : vector<24x1xf32>
    %23 = math.rsqrt %22 : vector<24x1xf32>
    %24 = vector.broadcast %23 : vector<24x1xf32> to vector<24x32xf32>
    %25 = arith.mulf %20, %24 : vector<24x32xf32>
    %26 = vector.broadcast %6 : vector<1x32xf32> to vector<24x32xf32>
    %27 = arith.mulf %25, %26 : vector<24x32xf32>
    %28 = vector.broadcast %7 : vector<1x32xf32> to vector<24x32xf32>
    %29 = arith.addf %27, %28 : vector<24x32xf32>
    %30 = arith.truncf %29 : vector<24x32xf32> to vector<24x32xbf16>
    %c0_9 = arith.constant 0 : index
    %c0_10 = arith.constant 0 : index
    %c0_11 = arith.constant 0 : index
    %31 = vector.load %arg7[%c0_9, %c0_10, %c0_11] : memref<1x32x96xbf16, #tpu.memory_space<vmem>>, vector<1x32x96xbf16>
    %32 = vector.shape_cast %31 : vector<1x32x96xbf16> to vector<32x96xbf16>
    %cst_12 = arith.constant dense<0.000000e+00> : vector<24x96xf32>
    %33 = tpu.matmul %30, %32, %cst_12 {dimension_numbers = #tpu.dot_dimension_numbers<[1], [0], [0], [1], [0, 0, 1, 1], [], []>} : vector<24x32xbf16>, vector<32x96xbf16>, vector<24x96xf32> -> vector<24x96xf32>
    %34 = vector.extract_strided_slice %33 {offsets = [0, 0], sizes = [24, 32], strides = [1, 1]} : vector<24x96xf32> to vector<24x32xf32>
    %35 = vector.shape_cast %34 : vector<24x32xf32> to vector<1x24x32xf32>
    %36 = vector.extract_strided_slice %5 {offsets = [4, 0], sizes = [1, 32], strides = [1, 1]} : vector<9x32xf32> to vector<1x32xf32>
    %37 = vector.shape_cast %36 : vector<1x32xf32> to vector<1x1x32xf32>
    %38 = vector.broadcast %37 : vector<1x1x32xf32> to vector<1x24x32xf32>
    %39 = arith.addf %35, %38 : vector<1x24x32xf32>
    %40 = vector.extract_strided_slice %33 {offsets = [0, 32], sizes = [24, 32], strides = [1, 1]} : vector<24x96xf32> to vector<24x32xf32>
    %41 = vector.shape_cast %40 : vector<24x32xf32> to vector<1x24x32xf32>
    %42 = vector.extract_strided_slice %5 {offsets = [5, 0], sizes = [1, 32], strides = [1, 1]} : vector<9x32xf32> to vector<1x32xf32>
    %43 = vector.shape_cast %42 : vector<1x32xf32> to vector<1x1x32xf32>
    %44 = vector.broadcast %43 : vector<1x1x32xf32> to vector<1x24x32xf32>
    %45 = arith.addf %41, %44 : vector<1x24x32xf32>
    %46 = vector.extract_strided_slice %33 {offsets = [0, 64], sizes = [24, 32], strides = [1, 1]} : vector<24x96xf32> to vector<24x32xf32>
    %47 = vector.shape_cast %46 : vector<24x32xf32> to vector<1x24x32xf32>
    %48 = vector.extract_strided_slice %5 {offsets = [6, 0], sizes = [1, 32], strides = [1, 1]} : vector<9x32xf32> to vector<1x32xf32>
    %49 = vector.shape_cast %48 : vector<1x32xf32> to vector<1x1x32xf32>
    %50 = vector.broadcast %49 : vector<1x1x32xf32> to vector<1x24x32xf32>
    %51 = arith.addf %47, %50 : vector<1x24x32xf32>
    %52 = arith.truncf %51 : vector<1x24x32xf32> to vector<1x24x32xbf16>
    %53 = tpu.iota {dimensions = array<i32: 2>} : vector<1x1x24xi32>
    %c17_i32 = arith.constant 17 : i32
    %54 = vector.broadcast %c17_i32 : i32 to vector<1x1x24xi32>
    %55 = arith.cmpi slt, %53, %54 : vector<1x1x24xi32>
    %cst_13 = arith.constant 0.000000e+00 : f32
    %cst_14 = arith.constant -1.000000e+30 : f32
    %56 = vector.broadcast %cst_13 : f32 to vector<1x1x24xf32>
    %57 = vector.broadcast %cst_14 : f32 to vector<1x1x24xf32>
    %58 = arith.select %55, %56, %57 : vector<1x1x24xi1>, vector<1x1x24xf32>
    %59 = vector.extract_strided_slice %5 {offsets = [7, 0], sizes = [1, 32], strides = [1, 1]} : vector<9x32xf32> to vector<1x32xf32>
    %60 = vector.broadcast %59 : vector<1x32xf32> to vector<24x32xf32>
    %61 = arith.addf %3, %60 : vector<24x32xf32>
    %62 = vector.extract_strided_slice %39 {offsets = [0, 0, 0], sizes = [1, 24, 8], strides = [1, 1, 1]} : vector<1x24x32xf32> to vector<1x24x8xf32>
    %63 = arith.truncf %62 : vector<1x24x8xf32> to vector<1x24x8xbf16>
    %64 = vector.extract_strided_slice %45 {offsets = [0, 0, 0], sizes = [1, 24, 8], strides = [1, 1, 1]} : vector<1x24x32xf32> to vector<1x24x8xf32>
    %65 = arith.truncf %64 : vector<1x24x8xf32> to vector<1x24x8xbf16>
    %66 = vector.extract_strided_slice %52 {offsets = [0, 0, 0], sizes = [1, 24, 8], strides = [1, 1, 1]} : vector<1x24x32xbf16> to vector<1x24x8xbf16>
    "tpu.trace_start"() <{level = 10 : i32, message = "bqd,bkd->bqk"}> : () -> ()
    %cst_15 = arith.constant dense<0.000000e+00> : vector<1x24x24xf32>
    %67 = tpu.matmul %63, %65, %cst_15 {dimension_numbers = #tpu.dot_dimension_numbers<[2], [2], [1], [1], [0, 0, 0, 1, 1, 1], [0], [0]>} : vector<1x24x8xbf16>, vector<1x24x8xbf16>, vector<1x24x24xf32> -> vector<1x24x24xf32>
    "tpu.trace_stop"() : () -> ()
    %cst_16 = arith.constant 0.353553385 : f32
    %68 = vector.broadcast %cst_16 : f32 to vector<1x24x24xf32>
    %69 = arith.mulf %67, %68 : vector<1x24x24xf32>
    %70 = vector.broadcast %58 : vector<1x1x24xf32> to vector<1x24x24xf32>
    %71 = arith.addf %69, %70 : vector<1x24x24xf32>
    %cst_17 = arith.constant dense<0xFF800000> : vector<1x24xf32>
    %72 = vector.multi_reduction <maximumf>, %71, %cst_17 [2] : vector<1x24x24xf32> to vector<1x24xf32>
    %73 = vector.shape_cast %72 : vector<1x24xf32> to vector<1x24x1xf32>
    %74 = vector.broadcast %73 : vector<1x24x1xf32> to vector<1x24x24xf32>
    %75 = arith.subf %71, %74 : vector<1x24x24xf32>
    %76 = math.exp %75 : vector<1x24x24xf32>
    %cst_18 = arith.constant dense<0.000000e+00> : vector<1x24xf32>
    %77 = vector.multi_reduction <add>, %76, %cst_18 [2] : vector<1x24x24xf32> to vector<1x24xf32>
    %78 = vector.shape_cast %77 : vector<1x24xf32> to vector<1x24x1xf32>
    %79 = tpu.reciprocal %78 {approx = true} : vector<1x24x1xf32> -> vector<1x24x1xf32>
    %80 = vector.broadcast %79 : vector<1x24x1xf32> to vector<1x24x24xf32>
    %81 = arith.mulf %76, %80 : vector<1x24x24xf32>
    %82 = arith.truncf %81 : vector<1x24x24xf32> to vector<1x24x24xbf16>
    "tpu.trace_start"() <{level = 10 : i32, message = "bqk,bkd->bqd"}> : () -> ()
    %cst_19 = arith.constant dense<0.000000e+00> : vector<1x24x8xf32>
    %83 = tpu.matmul %82, %66, %cst_19 {dimension_numbers = #tpu.dot_dimension_numbers<[2], [1], [1], [2], [0, 0, 0, 1, 1, 2], [0], [0]>} : vector<1x24x24xbf16>, vector<1x24x8xbf16>, vector<1x24x8xf32> -> vector<1x24x8xf32>
    "tpu.trace_stop"() : () -> ()
    %84 = vector.shape_cast %83 : vector<1x24x8xf32> to vector<24x8xf32>
    %85 = arith.truncf %84 : vector<24x8xf32> to vector<24x8xbf16>
    %c0_20 = arith.constant 0 : index
    %c0_21 = arith.constant 0 : index
    %c0_22 = arith.constant 0 : index
    %c0_23 = arith.constant 0 : index
    %86 = vector.load %arg8[%c0_20, %c0_21, %c0_22, %c0_23] : memref<1x4x8x32xbf16, #tpu.memory_space<vmem>>, vector<1x1x8x32xbf16>
    %87 = vector.shape_cast %86 : vector<1x1x8x32xbf16> to vector<8x32xbf16>
    %cst_24 = arith.constant dense<0.000000e+00> : vector<24x32xf32>
    %88 = tpu.matmul %85, %87, %cst_24 {dimension_numbers = #tpu.dot_dimension_numbers<[1], [0], [0], [1], [0, 0, 1, 1], [], []>} : vector<24x8xbf16>, vector<8x32xbf16>, vector<24x32xf32> -> vector<24x32xf32>
    %89 = arith.addf %61, %88 : vector<24x32xf32>
    %90 = vector.extract_strided_slice %39 {offsets = [0, 0, 8], sizes = [1, 24, 8], strides = [1, 1, 1]} : vector<1x24x32xf32> to vector<1x24x8xf32>
    %91 = arith.truncf %90 : vector<1x24x8xf32> to vector<1x24x8xbf16>
    %92 = vector.extract_strided_slice %45 {offsets = [0, 0, 8], sizes = [1, 24, 8], strides = [1, 1, 1]} : vector<1x24x32xf32> to vector<1x24x8xf32>
    %93 = arith.truncf %92 : vector<1x24x8xf32> to vector<1x24x8xbf16>
    %94 = vector.extract_strided_slice %52 {offsets = [0, 0, 8], sizes = [1, 24, 8], strides = [1, 1, 1]} : vector<1x24x32xbf16> to vector<1x24x8xbf16>
    "tpu.trace_start"() <{level = 10 : i32, message = "bqd,bkd->bqk"}> : () -> ()
    %cst_25 = arith.constant dense<0.000000e+00> : vector<1x24x24xf32>
    %95 = tpu.matmul %91, %93, %cst_25 {dimension_numbers = #tpu.dot_dimension_numbers<[2], [2], [1], [1], [0, 0, 0, 1, 1, 1], [0], [0]>} : vector<1x24x8xbf16>, vector<1x24x8xbf16>, vector<1x24x24xf32> -> vector<1x24x24xf32>
    "tpu.trace_stop"() : () -> ()
    %cst_26 = arith.constant 0.353553385 : f32
    %96 = vector.broadcast %cst_26 : f32 to vector<1x24x24xf32>
    %97 = arith.mulf %95, %96 : vector<1x24x24xf32>
    %98 = vector.broadcast %58 : vector<1x1x24xf32> to vector<1x24x24xf32>
    %99 = arith.addf %97, %98 : vector<1x24x24xf32>
    %cst_27 = arith.constant dense<0xFF800000> : vector<1x24xf32>
    %100 = vector.multi_reduction <maximumf>, %99, %cst_27 [2] : vector<1x24x24xf32> to vector<1x24xf32>
    %101 = vector.shape_cast %100 : vector<1x24xf32> to vector<1x24x1xf32>
    %102 = vector.broadcast %101 : vector<1x24x1xf32> to vector<1x24x24xf32>
    %103 = arith.subf %99, %102 : vector<1x24x24xf32>
    %104 = math.exp %103 : vector<1x24x24xf32>
    %cst_28 = arith.constant dense<0.000000e+00> : vector<1x24xf32>
    %105 = vector.multi_reduction <add>, %104, %cst_28 [2] : vector<1x24x24xf32> to vector<1x24xf32>
    %106 = vector.shape_cast %105 : vector<1x24xf32> to vector<1x24x1xf32>
    %107 = tpu.reciprocal %106 {approx = true} : vector<1x24x1xf32> -> vector<1x24x1xf32>
    %108 = vector.broadcast %107 : vector<1x24x1xf32> to vector<1x24x24xf32>
    %109 = arith.mulf %104, %108 : vector<1x24x24xf32>
    %110 = arith.truncf %109 : vector<1x24x24xf32> to vector<1x24x24xbf16>
    "tpu.trace_start"() <{level = 10 : i32, message = "bqk,bkd->bqd"}> : () -> ()
    %cst_29 = arith.constant dense<0.000000e+00> : vector<1x24x8xf32>
    %111 = tpu.matmul %110, %94, %cst_29 {dimension_numbers = #tpu.dot_dimension_numbers<[2], [1], [1], [2], [0, 0, 0, 1, 1, 2], [0], [0]>} : vector<1x24x24xbf16>, vector<1x24x8xbf16>, vector<1x24x8xf32> -> vector<1x24x8xf32>
    "tpu.trace_stop"() : () -> ()
    %112 = vector.shape_cast %111 : vector<1x24x8xf32> to vector<24x8xf32>
    %113 = arith.truncf %112 : vector<24x8xf32> to vector<24x8xbf16>
    %c0_30 = arith.constant 0 : index
    %c1 = arith.constant 1 : index
    %c0_31 = arith.constant 0 : index
    %c0_32 = arith.constant 0 : index
    %114 = vector.load %arg8[%c0_30, %c1, %c0_31, %c0_32] : memref<1x4x8x32xbf16, #tpu.memory_space<vmem>>, vector<1x1x8x32xbf16>
    %115 = vector.shape_cast %114 : vector<1x1x8x32xbf16> to vector<8x32xbf16>
    %cst_33 = arith.constant dense<0.000000e+00> : vector<24x32xf32>
    %116 = tpu.matmul %113, %115, %cst_33 {dimension_numbers = #tpu.dot_dimension_numbers<[1], [0], [0], [1], [0, 0, 1, 1], [], []>} : vector<24x8xbf16>, vector<8x32xbf16>, vector<24x32xf32> -> vector<24x32xf32>
    %117 = arith.addf %89, %116 : vector<24x32xf32>
    %118 = vector.extract_strided_slice %39 {offsets = [0, 0, 16], sizes = [1, 24, 8], strides = [1, 1, 1]} : vector<1x24x32xf32> to vector<1x24x8xf32>
    %119 = arith.truncf %118 : vector<1x24x8xf32> to vector<1x24x8xbf16>
    %120 = vector.extract_strided_slice %45 {offsets = [0, 0, 16], sizes = [1, 24, 8], strides = [1, 1, 1]} : vector<1x24x32xf32> to vector<1x24x8xf32>
    %121 = arith.truncf %120 : vector<1x24x8xf32> to vector<1x24x8xbf16>
    %122 = vector.extract_strided_slice %52 {offsets = [0, 0, 16], sizes = [1, 24, 8], strides = [1, 1, 1]} : vector<1x24x32xbf16> to vector<1x24x8xbf16>
    "tpu.trace_start"() <{level = 10 : i32, message = "bqd,bkd->bqk"}> : () -> ()
    %cst_34 = arith.constant dense<0.000000e+00> : vector<1x24x24xf32>
    %123 = tpu.matmul %119, %121, %cst_34 {dimension_numbers = #tpu.dot_dimension_numbers<[2], [2], [1], [1], [0, 0, 0, 1, 1, 1], [0], [0]>} : vector<1x24x8xbf16>, vector<1x24x8xbf16>, vector<1x24x24xf32> -> vector<1x24x24xf32>
    "tpu.trace_stop"() : () -> ()
    %cst_35 = arith.constant 0.353553385 : f32
    %124 = vector.broadcast %cst_35 : f32 to vector<1x24x24xf32>
    %125 = arith.mulf %123, %124 : vector<1x24x24xf32>
    %126 = vector.broadcast %58 : vector<1x1x24xf32> to vector<1x24x24xf32>
    %127 = arith.addf %125, %126 : vector<1x24x24xf32>
    %cst_36 = arith.constant dense<0xFF800000> : vector<1x24xf32>
    %128 = vector.multi_reduction <maximumf>, %127, %cst_36 [2] : vector<1x24x24xf32> to vector<1x24xf32>
    %129 = vector.shape_cast %128 : vector<1x24xf32> to vector<1x24x1xf32>
    %130 = vector.broadcast %129 : vector<1x24x1xf32> to vector<1x24x24xf32>
    %131 = arith.subf %127, %130 : vector<1x24x24xf32>
    %132 = math.exp %131 : vector<1x24x24xf32>
    %cst_37 = arith.constant dense<0.000000e+00> : vector<1x24xf32>
    %133 = vector.multi_reduction <add>, %132, %cst_37 [2] : vector<1x24x24xf32> to vector<1x24xf32>
    %134 = vector.shape_cast %133 : vector<1x24xf32> to vector<1x24x1xf32>
    %135 = tpu.reciprocal %134 {approx = true} : vector<1x24x1xf32> -> vector<1x24x1xf32>
    %136 = vector.broadcast %135 : vector<1x24x1xf32> to vector<1x24x24xf32>
    %137 = arith.mulf %132, %136 : vector<1x24x24xf32>
    %138 = arith.truncf %137 : vector<1x24x24xf32> to vector<1x24x24xbf16>
    "tpu.trace_start"() <{level = 10 : i32, message = "bqk,bkd->bqd"}> : () -> ()
    %cst_38 = arith.constant dense<0.000000e+00> : vector<1x24x8xf32>
    %139 = tpu.matmul %138, %122, %cst_38 {dimension_numbers = #tpu.dot_dimension_numbers<[2], [1], [1], [2], [0, 0, 0, 1, 1, 2], [0], [0]>} : vector<1x24x24xbf16>, vector<1x24x8xbf16>, vector<1x24x8xf32> -> vector<1x24x8xf32>
    "tpu.trace_stop"() : () -> ()
    %140 = vector.shape_cast %139 : vector<1x24x8xf32> to vector<24x8xf32>
    %141 = arith.truncf %140 : vector<24x8xf32> to vector<24x8xbf16>
    %c0_39 = arith.constant 0 : index
    %c2 = arith.constant 2 : index
    %c0_40 = arith.constant 0 : index
    %c0_41 = arith.constant 0 : index
    %142 = vector.load %arg8[%c0_39, %c2, %c0_40, %c0_41] : memref<1x4x8x32xbf16, #tpu.memory_space<vmem>>, vector<1x1x8x32xbf16>
    %143 = vector.shape_cast %142 : vector<1x1x8x32xbf16> to vector<8x32xbf16>
    %cst_42 = arith.constant dense<0.000000e+00> : vector<24x32xf32>
    %144 = tpu.matmul %141, %143, %cst_42 {dimension_numbers = #tpu.dot_dimension_numbers<[1], [0], [0], [1], [0, 0, 1, 1], [], []>} : vector<24x8xbf16>, vector<8x32xbf16>, vector<24x32xf32> -> vector<24x32xf32>
    %145 = arith.addf %117, %144 : vector<24x32xf32>
    %146 = vector.extract_strided_slice %39 {offsets = [0, 0, 24], sizes = [1, 24, 8], strides = [1, 1, 1]} : vector<1x24x32xf32> to vector<1x24x8xf32>
    %147 = arith.truncf %146 : vector<1x24x8xf32> to vector<1x24x8xbf16>
    %148 = vector.extract_strided_slice %45 {offsets = [0, 0, 24], sizes = [1, 24, 8], strides = [1, 1, 1]} : vector<1x24x32xf32> to vector<1x24x8xf32>
    %149 = arith.truncf %148 : vector<1x24x8xf32> to vector<1x24x8xbf16>
    %150 = vector.extract_strided_slice %52 {offsets = [0, 0, 24], sizes = [1, 24, 8], strides = [1, 1, 1]} : vector<1x24x32xbf16> to vector<1x24x8xbf16>
    "tpu.trace_start"() <{level = 10 : i32, message = "bqd,bkd->bqk"}> : () -> ()
    %cst_43 = arith.constant dense<0.000000e+00> : vector<1x24x24xf32>
    %151 = tpu.matmul %147, %149, %cst_43 {dimension_numbers = #tpu.dot_dimension_numbers<[2], [2], [1], [1], [0, 0, 0, 1, 1, 1], [0], [0]>} : vector<1x24x8xbf16>, vector<1x24x8xbf16>, vector<1x24x24xf32> -> vector<1x24x24xf32>
    "tpu.trace_stop"() : () -> ()
    %cst_44 = arith.constant 0.353553385 : f32
    %152 = vector.broadcast %cst_44 : f32 to vector<1x24x24xf32>
    %153 = arith.mulf %151, %152 : vector<1x24x24xf32>
    %154 = vector.broadcast %58 : vector<1x1x24xf32> to vector<1x24x24xf32>
    %155 = arith.addf %153, %154 : vector<1x24x24xf32>
    %cst_45 = arith.constant dense<0xFF800000> : vector<1x24xf32>
    %156 = vector.multi_reduction <maximumf>, %155, %cst_45 [2] : vector<1x24x24xf32> to vector<1x24xf32>
    %157 = vector.shape_cast %156 : vector<1x24xf32> to vector<1x24x1xf32>
    %158 = vector.broadcast %157 : vector<1x24x1xf32> to vector<1x24x24xf32>
    %159 = arith.subf %155, %158 : vector<1x24x24xf32>
    %160 = math.exp %159 : vector<1x24x24xf32>
    %cst_46 = arith.constant dense<0.000000e+00> : vector<1x24xf32>
    %161 = vector.multi_reduction <add>, %160, %cst_46 [2] : vector<1x24x24xf32> to vector<1x24xf32>
    %162 = vector.shape_cast %161 : vector<1x24xf32> to vector<1x24x1xf32>
    %163 = tpu.reciprocal %162 {approx = true} : vector<1x24x1xf32> -> vector<1x24x1xf32>
    %164 = vector.broadcast %163 : vector<1x24x1xf32> to vector<1x24x24xf32>
    %165 = arith.mulf %160, %164 : vector<1x24x24xf32>
    %166 = arith.truncf %165 : vector<1x24x24xf32> to vector<1x24x24xbf16>
    "tpu.trace_start"() <{level = 10 : i32, message = "bqk,bkd->bqd"}> : () -> ()
    %cst_47 = arith.constant dense<0.000000e+00> : vector<1x24x8xf32>
    %167 = tpu.matmul %166, %150, %cst_47 {dimension_numbers = #tpu.dot_dimension_numbers<[2], [1], [1], [2], [0, 0, 0, 1, 1, 2], [0], [0]>} : vector<1x24x24xbf16>, vector<1x24x8xbf16>, vector<1x24x8xf32> -> vector<1x24x8xf32>
    "tpu.trace_stop"() : () -> ()
    %168 = vector.shape_cast %167 : vector<1x24x8xf32> to vector<24x8xf32>
    %169 = arith.truncf %168 : vector<24x8xf32> to vector<24x8xbf16>
    %c0_48 = arith.constant 0 : index
    %c3 = arith.constant 3 : index
    %c0_49 = arith.constant 0 : index
    %c0_50 = arith.constant 0 : index
    %170 = vector.load %arg8[%c0_48, %c3, %c0_49, %c0_50] : memref<1x4x8x32xbf16, #tpu.memory_space<vmem>>, vector<1x1x8x32xbf16>
    %171 = vector.shape_cast %170 : vector<1x1x8x32xbf16> to vector<8x32xbf16>
    %cst_51 = arith.constant dense<0.000000e+00> : vector<24x32xf32>
    %172 = tpu.matmul %169, %171, %cst_51 {dimension_numbers = #tpu.dot_dimension_numbers<[1], [0], [0], [1], [0, 0, 1, 1], [], []>} : vector<24x8xbf16>, vector<8x32xbf16>, vector<24x32xf32> -> vector<24x32xf32>
    %173 = arith.addf %145, %172 : vector<24x32xf32>
    %174 = vector.extract_strided_slice %5 {offsets = [2, 0], sizes = [1, 32], strides = [1, 1]} : vector<9x32xf32> to vector<1x32xf32>
    %175 = vector.extract_strided_slice %5 {offsets = [3, 0], sizes = [1, 32], strides = [1, 1]} : vector<9x32xf32> to vector<1x32xf32>
    %cst_52 = arith.constant dense<0.000000e+00> : vector<24xf32>
    %176 = vector.multi_reduction <add>, %173, %cst_52 [1] : vector<24x32xf32> to vector<24xf32>
    %177 = vector.shape_cast %176 : vector<24xf32> to vector<24x1xf32>
    %cst_53 = arith.constant 3.200000e+01 : f32
    %178 = vector.broadcast %cst_53 : f32 to vector<24x1xf32>
    %179 = arith.divf %177, %178 : vector<24x1xf32>
    %180 = vector.broadcast %179 : vector<24x1xf32> to vector<24x32xf32>
    %181 = arith.subf %173, %180 : vector<24x32xf32>
    %182 = arith.mulf %181, %181 : vector<24x32xf32>
    %cst_54 = arith.constant dense<0.000000e+00> : vector<24xf32>
    %183 = vector.multi_reduction <add>, %182, %cst_54 [1] : vector<24x32xf32> to vector<24xf32>
    %184 = vector.shape_cast %183 : vector<24xf32> to vector<24x1xf32>
    %cst_55 = arith.constant 3.200000e+01 : f32
    %185 = vector.broadcast %cst_55 : f32 to vector<24x1xf32>
    %186 = arith.divf %184, %185 : vector<24x1xf32>
    %187 = vector.broadcast %179 : vector<24x1xf32> to vector<24x32xf32>
    %188 = arith.subf %173, %187 : vector<24x32xf32>
    %cst_56 = arith.constant 9.99999974E-6 : f32
    %189 = vector.broadcast %cst_56 : f32 to vector<24x1xf32>
    %190 = arith.addf %186, %189 : vector<24x1xf32>
    %191 = math.rsqrt %190 : vector<24x1xf32>
    %192 = vector.broadcast %191 : vector<24x1xf32> to vector<24x32xf32>
    %193 = arith.mulf %188, %192 : vector<24x32xf32>
    %194 = vector.broadcast %174 : vector<1x32xf32> to vector<24x32xf32>
    %195 = arith.mulf %193, %194 : vector<24x32xf32>
    %196 = vector.broadcast %175 : vector<1x32xf32> to vector<24x32xf32>
    %197 = arith.addf %195, %196 : vector<24x32xf32>
    %198 = arith.truncf %197 : vector<24x32xf32> to vector<24x32xbf16>
    %c0_57 = arith.constant 0 : index
    %c0_58 = arith.constant 0 : index
    %c0_59 = arith.constant 0 : index
    %199 = vector.load %arg9[%c0_57, %c0_58, %c0_59] : memref<1x32x128xbf16, #tpu.memory_space<vmem>>, vector<1x32x128xbf16>
    %200 = vector.shape_cast %199 : vector<1x32x128xbf16> to vector<32x128xbf16>
    %cst_60 = arith.constant dense<0.000000e+00> : vector<24x128xf32>
    %201 = tpu.matmul %198, %200, %cst_60 {dimension_numbers = #tpu.dot_dimension_numbers<[1], [0], [0], [1], [0, 0, 1, 1], [], []>} : vector<24x32xbf16>, vector<32x128xbf16>, vector<24x128xf32> -> vector<24x128xf32>
    %c0_61 = arith.constant 0 : index
    %c0_62 = arith.constant 0 : index
    %c0_63 = arith.constant 0 : index
    %202 = vector.load %arg10[%c0_61, %c0_62, %c0_63] : memref<1x1x128xf32, #tpu.memory_space<vmem>>, vector<1x1x128xf32>
    %203 = vector.shape_cast %202 : vector<1x1x128xf32> to vector<1x128xf32>
    %204 = vector.broadcast %203 : vector<1x128xf32> to vector<24x128xf32>
    %205 = arith.addf %201, %204 : vector<24x128xf32>
    %cst_64 = arith.constant 5.000000e-01 : f32
    %206 = vector.broadcast %cst_64 : f32 to vector<24x128xf32>
    %207 = arith.mulf %206, %205 : vector<24x128xf32>
    %cst_65 = arith.constant 0.707106769 : f32
    %208 = vector.broadcast %cst_65 : f32 to vector<24x128xf32>
    %209 = arith.mulf %205, %208 : vector<24x128xf32>
    %210 = math.erf %209 : vector<24x128xf32>
    %cst_66 = arith.constant 1.000000e+00 : f32
    %211 = vector.broadcast %cst_66 : f32 to vector<24x128xf32>
    %212 = arith.addf %211, %210 : vector<24x128xf32>
    %213 = arith.mulf %207, %212 : vector<24x128xf32>
    %214 = arith.truncf %213 : vector<24x128xf32> to vector<24x128xbf16>
    %c0_67 = arith.constant 0 : index
    %c0_68 = arith.constant 0 : index
    %c0_69 = arith.constant 0 : index
    %215 = vector.load %arg11[%c0_67, %c0_68, %c0_69] : memref<1x128x32xbf16, #tpu.memory_space<vmem>>, vector<1x128x32xbf16>
    %216 = vector.shape_cast %215 : vector<1x128x32xbf16> to vector<128x32xbf16>
    %cst_70 = arith.constant dense<0.000000e+00> : vector<24x32xf32>
    %217 = tpu.matmul %214, %216, %cst_70 {dimension_numbers = #tpu.dot_dimension_numbers<[1], [0], [0], [1], [0, 0, 1, 1], [], []>} : vector<24x128xbf16>, vector<128x32xbf16>, vector<24x32xf32> -> vector<24x32xf32>
    %218 = vector.extract_strided_slice %5 {offsets = [8, 0], sizes = [1, 32], strides = [1, 1]} : vector<9x32xf32> to vector<1x32xf32>
    %219 = vector.broadcast %218 : vector<1x32xf32> to vector<24x32xf32>
    %220 = arith.addf %217, %219 : vector<24x32xf32>
    %221 = arith.addf %173, %220 : vector<24x32xf32>
    %c0_71 = arith.constant 0 : index
    %c0_72 = arith.constant 0 : index
    %222 = vector.load %arg15[%c0_71, %c0_72] : memref<24x32xf32, #tpu.memory_space<vmem>>, vector<24x32xf32>
    tpu.vector_store %arg15[%c0_71, %c0_72], %221 {strides = array<i32>} : memref<24x32xf32, #tpu.memory_space<vmem>>, vector<24x32xf32>,
    %c1_i32 = arith.constant 1 : i32
    %223 = arith.cmpi eq, %arg1, %c1_i32 : i32
    %224 = arith.extui %223 : i1 to i32
    %c0_i32_73 = arith.constant 0 : i32
    %225 = arith.cmpi ne, %224, %c0_i32_73 : i32
    scf.if %225 {
      %226 = vector.extract_strided_slice %221 {offsets = [0, 0], sizes = [1, 32], strides = [1, 1]} : vector<24x32xf32> to vector<1x32xf32>
      %c0_74 = arith.constant 0 : index
      %c0_75 = arith.constant 0 : index
      %227 = vector.load %arg12[%c0_74, %c0_75] : memref<2x32xf32, #tpu.memory_space<vmem>>, vector<1x32xf32>
      %c1_76 = arith.constant 1 : index
      %c0_77 = arith.constant 0 : index
      %228 = vector.load %arg12[%c1_76, %c0_77] : memref<2x32xf32, #tpu.memory_space<vmem>>, vector<1x32xf32>
      %cst_78 = arith.constant dense<0.000000e+00> : vector<1xf32>
      %229 = vector.multi_reduction <add>, %226, %cst_78 [1] : vector<1x32xf32> to vector<1xf32>
      %230 = vector.shape_cast %229 : vector<1xf32> to vector<1x1xf32>
      %cst_79 = arith.constant 3.200000e+01 : f32
      %231 = vector.broadcast %cst_79 : f32 to vector<1x1xf32>
      %232 = arith.divf %230, %231 : vector<1x1xf32>
      %233 = vector.broadcast %232 : vector<1x1xf32> to vector<1x32xf32>
      %234 = arith.subf %226, %233 : vector<1x32xf32>
      %235 = arith.mulf %234, %234 : vector<1x32xf32>
      %cst_80 = arith.constant dense<0.000000e+00> : vector<1xf32>
      %236 = vector.multi_reduction <add>, %235, %cst_80 [1] : vector<1x32xf32> to vector<1xf32>
      %237 = vector.shape_cast %236 : vector<1xf32> to vector<1x1xf32>
      %cst_81 = arith.constant 3.200000e+01 : f32
      %238 = vector.broadcast %cst_81 : f32 to vector<1x1xf32>
      %239 = arith.divf %237, %238 : vector<1x1xf32>
      %240 = vector.broadcast %232 : vector<1x1xf32> to vector<1x32xf32>
      %241 = arith.subf %226, %240 : vector<1x32xf32>
      %cst_82 = arith.constant 9.99999974E-6 : f32
      %242 = vector.broadcast %cst_82 : f32 to vector<1x1xf32>
      %243 = arith.addf %239, %242 : vector<1x1xf32>
      %244 = math.rsqrt %243 : vector<1x1xf32>
      %245 = vector.broadcast %244 : vector<1x1xf32> to vector<1x32xf32>
      %246 = arith.mulf %241, %245 : vector<1x32xf32>
      %247 = arith.mulf %246, %227 : vector<1x32xf32>
      %248 = arith.addf %247, %228 : vector<1x32xf32>
      %249 = arith.truncf %248 : vector<1x32xf32> to vector<1x32xbf16>
      %c0_83 = arith.constant 0 : index
      %c0_84 = arith.constant 0 : index
      %250 = vector.load %arg13[%c0_83, %c0_84] : memref<32x16xbf16, #tpu.memory_space<vmem>>, vector<32x16xbf16>
      %cst_85 = arith.constant dense<0.000000e+00> : vector<1x16xf32>
      %251 = tpu.matmul %249, %250, %cst_85 {dimension_numbers = #tpu.dot_dimension_numbers<[1], [0], [0], [1], [0, 0, 1, 1], [], []>} : vector<1x32xbf16>, vector<32x16xbf16>, vector<1x16xf32> -> vector<1x16xf32>
      %c0_86 = arith.constant 0 : index
      %c0_87 = arith.constant 0 : index
      %c0_88 = arith.constant 0 : index
      %252 = vector.load %arg14[%c0_86, %c0_87, %c0_88] : memref<1x1x16xf32, #tpu.memory_space<vmem>>, vector<1x1x16xf32>
      %253 = vector.shape_cast %252 : vector<1x1x16xf32> to vector<1x16xf32>
      %254 = vector.shape_cast %251 : vector<1x16xf32> to vector<1x1x16xf32>
      tpu.vector_store %arg14[%c0_86, %c0_87, %c0_88], %254 {strides = array<i32>} : memref<1x1x16xf32, #tpu.memory_space<vmem>>, vector<1x1x16xf32>,
    } else {
    }
    return
  }
  func.func @transform_0(%arg0: i32, %arg1: i32) -> (i32, i32, i32) {
    %c0_i32 = arith.constant 0 : i32
    %c0_i32_0 = arith.constant 0 : i32
    %c0_i32_1 = arith.constant 0 : i32
    return %arg0, %c0_i32, %c0_i32_0 : i32, i32, i32
  }
  func.func @transform_1(%arg0: i32, %arg1: i32) -> (i32, i32) {
    %c0_i32 = arith.constant 0 : i32
    %c0_i32_0 = arith.constant 0 : i32
    %c0_i32_1 = arith.constant 0 : i32
    return %c0_i32, %c0_i32_0 : i32, i32
  }
  func.func @transform_2(%arg0: i32, %arg1: i32) -> (i32, i32) {
    %c0_i32 = arith.constant 0 : i32
    %c0_i32_0 = arith.constant 0 : i32
    %c0_i32_1 = arith.constant 0 : i32
    return %c0_i32, %c0_i32_0 : i32, i32
  }
  func.func @transform_3(%arg0: i32, %arg1: i32) -> (i32, i32) {
    %c0_i32 = arith.constant 0 : i32
    %c0_i32_0 = arith.constant 0 : i32
    %c0_i32_1 = arith.constant 0 : i32
    return %c0_i32, %c0_i32_0 : i32, i32
  }
  func.func @transform_4(%arg0: i32, %arg1: i32) -> (i32, i32, i32) {
    %c0_i32 = arith.constant 0 : i32
    %c0_i32_0 = arith.constant 0 : i32
    %c0_i32_1 = arith.constant 0 : i32
    return %arg1, %c0_i32, %c0_i32_0 : i32, i32, i32
  }
  func.func @transform_5(%arg0: i32, %arg1: i32) -> (i32, i32, i32) {
    %c0_i32 = arith.constant 0 : i32
    %c0_i32_0 = arith.constant 0 : i32
    %c0_i32_1 = arith.constant 0 : i32
    return %arg1, %c0_i32, %c0_i32_0 : i32, i32, i32
  }
  func.func @transform_6(%arg0: i32, %arg1: i32) -> (i32, i32, i32, i32) {
    %c0_i32 = arith.constant 0 : i32
    %c0_i32_0 = arith.constant 0 : i32
    %c0_i32_1 = arith.constant 0 : i32
    %c0_i32_2 = arith.constant 0 : i32
    return %arg1, %c0_i32, %c0_i32_0, %c0_i32_1 : i32, i32, i32, i32
  }
  func.func @transform_7(%arg0: i32, %arg1: i32) -> (i32, i32, i32) {
    %c0_i32 = arith.constant 0 : i32
    %c0_i32_0 = arith.constant 0 : i32
    %c0_i32_1 = arith.constant 0 : i32
    return %arg1, %c0_i32, %c0_i32_0 : i32, i32, i32
  }
  func.func @transform_8(%arg0: i32, %arg1: i32) -> (i32, i32, i32) {
    %c0_i32 = arith.constant 0 : i32
    %c0_i32_0 = arith.constant 0 : i32
    %c0_i32_1 = arith.constant 0 : i32
    return %arg1, %c0_i32, %c0_i32_0 : i32, i32, i32
  }
  func.func @transform_9(%arg0: i32, %arg1: i32) -> (i32, i32, i32) {
    %c0_i32 = arith.constant 0 : i32
    %c0_i32_0 = arith.constant 0 : i32
    %c0_i32_1 = arith.constant 0 : i32
    return %arg1, %c0_i32, %c0_i32_0 : i32, i32, i32
  }
  func.func @transform_10(%arg0: i32, %arg1: i32) -> (i32, i32) {
    %c0_i32 = arith.constant 0 : i32
    %c0_i32_0 = arith.constant 0 : i32
    %c0_i32_1 = arith.constant 0 : i32
    return %c0_i32, %c0_i32_0 : i32, i32
  }
  func.func @transform_11(%arg0: i32, %arg1: i32) -> (i32, i32) {
    %c0_i32 = arith.constant 0 : i32
    %c0_i32_0 = arith.constant 0 : i32
    %c0_i32_1 = arith.constant 0 : i32
    return %c0_i32, %c0_i32_0 : i32, i32
  }
  func.func @transform_12(%arg0: i32, %arg1: i32) -> (i32, i32, i32) {
    %c0_i32 = arith.constant 0 : i32
    %c0_i32_0 = arith.constant 0 : i32
    %c0_i32_1 = arith.constant 0 : i32
    return %arg0, %c0_i32, %c0_i32_0 : i32, i32, i32
  }
}

</mosaic_0001>

<llo_original>
// kernel: tpu_custom_call.1
$region0: #{tpu_custom_call.1}
  #allocation0 [shape = 'u32[]', space=smem, size = 0x4, offset = 0x4, fixed_abs, tag = 'smem constant byte address 0x4 - core index']
  #allocation1 [shape = 'u32[144,128]{1,0:T(1,128)}', space=vmem, size = 0x12000, scoped, tag = 'internal scratch']
  #allocation2 [shape = 'f32[24,32]{1,0:T(8,128)}', space=vmem, size = 0x3000, scoped, tag = 'scratch operand']
  %s0 = inlined_call_operand.vmem [shape: bf16[2,24,48], index: 0, kind: input, shape index: {}]
  %s1 = inlined_call_operand.vmem [shape: bf16[48,32], index: 1, kind: input, shape index: {}]
  %s2 = inlined_call_operand.vmem [shape: f32[24,32], index: 2, kind: input, shape index: {}]
  %s3 = inlined_call_operand.vmem [shape: f32[2,32], index: 3, kind: input, shape index: {}]
  %s4 = inlined_call_operand.vmem [shape: f32[2,9,32], index: 4, kind: input, shape index: {}]
  %s5 = inlined_call_operand.vmem [shape: bf16[2,32,96], index: 5, kind: input, shape index: {}]
  %s6 = inlined_call_operand.vmem [shape: bf16[2,4,8,32], index: 6, kind: input, shape index: {}]
  %s7 = inlined_call_operand.vmem [shape: bf16[2,32,128], index: 7, kind: input, shape index: {}]
  %s8 = inlined_call_operand.vmem [shape: f32[2,1,128], index: 8, kind: input, shape index: {}]
  %s9 = inlined_call_operand.vmem [shape: bf16[2,128,32], index: 9, kind: input, shape index: {}]
  %s10 = inlined_call_operand.vmem [shape: f32[2,32], index: 10, kind: input, shape index: {}]
  %s11 = inlined_call_operand.vmem [shape: bf16[32,16], index: 11, kind: input, shape index: {}]
  %s12 = inlined_call_operand.hbm [shape: f32[2,1,16], index: 12, kind: output, shape index: {}]
  %s13 = sld [smem:[#allocation0]]
  $region89: #{tpu_custom_call.1} parent=0
    _
  %s15 = ssub.s32 1, %s13
  %s16 = scalar_select 0, %s15, %s13
  $region1: #{tpu_custom_call.1} parent=0
    #allocation3 [shape = 'u8[1024]{0}', space=vmem, size = 0x400, scoped, tag = 'output window, operand 0']
    #allocation4 [shape = 's32[2]{0}', space=sflag, size = 0x8, scoped, tag = 'scoped memory for tpu_custom_call.1']
    %17 = vsyncpa [#allocation4], 0
    %s18 = scalar_lea.sflag [#allocation4], 1
    %19 = vsyncpa %s18, 0
    loop: start=0, step=1, limit=6
    $region2: #{tpu_custom_call.1} parent=1 // loop_pre_header
      _
    $region3: #{tpu_custom_call.1} parent=1 // loop_header
      %s21 = sphi 0, %s25
      %p22 = scmp.ge.s32.totalorder %s21, 6
      %s28 = sphi 0, %s40
      %s29 = sphi 0, %s36
      %s30 = sphi 0, %s28
      %s31 = sphi 0, %s29
      %s32 = sphi 0, %s30
      %s33 = sphi 0, %s31
      %s43 = sphi 0, %s45
      %s46 = sphi 0, %s43
      %s47 = sphi 0, %s46
      %s63 = sphi 0, %s47
      %s67 = sphi 0, %s67
      %s69 = sphi 0, %s67
      %s70 = sphi 0, %s69
      %s84 = sphi 0, %s70
      %s88 = sphi 0, %s88
      %s90 = sphi 0, %s88
      %s91 = sphi 0, %s90
      %s105 = sphi 0, %s91
      %s109 = sphi 0, %s109
      %s111 = sphi 0, %s109
      %s112 = sphi 0, %s111
      %s126 = sphi 0, %s112
      %s132 = sphi 0, %s134
      %s135 = sphi 0, %s132
      %s136 = sphi 0, %s135
      %s152 = sphi 0, %s136
      %s158 = sphi 0, %s160
      %s161 = sphi 0, %s158
      %s162 = sphi 0, %s161
      %s178 = sphi 0, %s162
      %s184 = sphi 0, %s186
      %s187 = sphi 0, %s184
      %s188 = sphi 0, %s187
      %s204 = sphi 0, %s188
      %s210 = sphi 0, %s212
      %s213 = sphi 0, %s210
      %s214 = sphi 0, %s213
      %s230 = sphi 0, %s214
      %s236 = sphi 0, %s238
      %s239 = sphi 0, %s236
      %s240 = sphi 0, %s239
      %s256 = sphi 0, %s240
      %s262 = sphi 0, %s264
      %s265 = sphi 0, %s262
      %s266 = sphi 0, %s265
      %s282 = sphi 0, %s266
      %s286 = sphi 0, %s286
      %s288 = sphi 0, %s286
      %s289 = sphi 0, %s288
      %s303 = sphi 0, %s289
      %s307 = sphi 0, %s307
      %s309 = sphi 0, %s307
      %s310 = sphi 0, %s309
      %s324 = sphi 0, %s310
      %s330 = sphi 0, %s332
      %s333 = sphi 0, %s330
      %s334 = sphi 0, %s333
      %s350 = sphi 0, %s334
    $region4: #{tpu_custom_call.1} parent=1 // loop_header_branch
      %24 = sbr.rel (%p22) target = $region8
    $region5: #{tpu_custom_call.1} parent=1 // loop_body
      %s26 = ssub.s32 %s21, 1
      %s27 = ssub.s32 %s21, 2
      %s34 = sadd.s32 1, %s29
      %p35 = scmp.ge.s32.totalorder %s34, 2
      %s36 = scalar_select %p35, 0, %s34
      %s37 = sadd.s32 1, %s28
      %s38 = scalar_select %p35, %s37, %s28
      %p39 = scmp.ge.s32.totalorder %s38, 2
      %s40 = scalar_select %p39, 0, %s38
      %s41 = ssub.s32 %s28, %s40
      %p42 = scmp.eq.s32.totalorder %s41, 0
      %s44 = sadd.s32 %s43, 1
      %s45 = scalar_select %p42, %s43, %s44
      %p48 = pneg %p42
      %p49 = scmp.eq.s32.totalorder %s21, 3
      %p50 = por %p48, %p49
      %p51 = scmp.ne.s32.totalorder %s43, %s46
      %p52 = scmp.eq.s32.totalorder %s21, 0
      %p53 = por %p51, %p52
      %p54 = scmp.ne.s32.totalorder %s43, %s46
      %p55 = scmp.eq.s32.totalorder %s26, 3
      %p56 = por %p54, %p55
      %p57 = scmp.ne.s32.totalorder %s46, %s47
      %p58 = scmp.eq.s32.totalorder %s26, 0
      %p59 = por %p57, %p58
      %p60 = scmp.ne.s32.totalorder %s46, %s47
      %p61 = scmp.eq.s32.totalorder %s27, 3
      %p62 = por %p60, %p61
      %p64 = scmp.ne.s32.totalorder %s47, %s63
      %p65 = scmp.eq.s32.totalorder %s27, 0
      %p66 = por %p64, %p65
      %s68 = sadd.s32 %s67, 1
      %p71 = scmp.eq.s32.totalorder %s21, 3
      %p72 = scmp.ne.s32.totalorder %s67, %s69
      %p73 = scmp.eq.s32.totalorder %s21, 0
      %p74 = por %p72, %p73
      %p75 = scmp.ne.s32.totalorder %s67, %s69
      %p76 = scmp.eq.s32.totalorder %s26, 3
      %p77 = por %p75, %p76
      %p78 = scmp.ne.s32.totalorder %s69, %s70
      %p79 = scmp.eq.s32.totalorder %s26, 0
      %p80 = por %p78, %p79
      %p81 = scmp.ne.s32.totalorder %s69, %s70
      %p82 = scmp.eq.s32.totalorder %s27, 3
      %p83 = por %p81, %p82
      %p85 = scmp.ne.s32.totalorder %s70, %s84
      %p86 = scmp.eq.s32.totalorder %s27, 0
      %p87 = por %p85, %p86
      %s89 = sadd.s32 %s88, 1
      %p92 = scmp.eq.s32.totalorder %s21, 3
      %p93 = scmp.ne.s32.totalorder %s88, %s90
      %p94 = scmp.eq.s32.totalorder %s21, 0
      %p95 = por %p93, %p94
      %p96 = scmp.ne.s32.totalorder %s88, %s90
      %p97 = scmp.eq.s32.totalorder %s26, 3
      %p98 = por %p96, %p97
      %p99 = scmp.ne.s32.totalorder %s90, %s91
      %p100 = scmp.eq.s32.totalorder %s26, 0
      %p101 = por %p99, %p100
      %p102 = scmp.ne.s32.totalorder %s90, %s91
      %p103 = scmp.eq.s32.totalorder %s27, 3
      %p104 = por %p102, %p103
      %p106 = scmp.ne.s32.totalorder %s91, %s105
      %p107 = scmp.eq.s32.totalorder %s27, 0
      %p108 = por %p106, %p107
      %s110 = sadd.s32 %s109, 1
      %p113 = scmp.eq.s32.totalorder %s21, 3
      %p114 = scmp.ne.s32.totalorder %s109, %s111
      %p115 = scmp.eq.s32.totalorder %s21, 0
      %p116 = por %p114, %p115
      %p117 = scmp.ne.s32.totalorder %s109, %s111
      %p118 = scmp.eq.s32.totalorder %s26, 3
      %p119 = por %p117, %p118
      %p120 = scmp.ne.s32.totalorder %s111, %s112
      %p121 = scmp.eq.s32.totalorder %s26, 0
      %p122 = por %p120, %p121
      %p123 = scmp.ne.s32.totalorder %s111, %s112
      %p124 = scmp.eq.s32.totalorder %s27, 3
      %p125 = por %p123, %p124
      %p127 = scmp.ne.s32.totalorder %s112, %s126
      %p128 = scmp.eq.s32.totalorder %s27, 0
      %p129 = por %p127, %p128
      %s130 = ssub.s32 %s29, %s36
      %p131 = scmp.eq.s32.totalorder %s130, 0
      %s133 = sadd.s32 %s132, 1
      %s134 = scalar_select %p131, %s132, %s133
      %p137 = pneg %p131
      %p138 = scmp.eq.s32.totalorder %s21, 3
      %p139 = por %p137, %p138
      %p140 = scmp.ne.s32.totalorder %s132, %s135
      %p141 = scmp.eq.s32.totalorder %s21, 0
      %p142 = por %p140, %p141
      %p143 = scmp.ne.s32.totalorder %s132, %s135
      %p144 = scmp.eq.s32.totalorder %s26, 3
      %p145 = por %p143, %p144
      %p146 = scmp.ne.s32.totalorder %s135, %s136
      %p147 = scmp.eq.s32.totalorder %s26, 0
      %p148 = por %p146, %p147
      %p149 = scmp.ne.s32.totalorder %s135, %s136
      %p150 = scmp.eq.s32.totalorder %s27, 3
      %p151 = por %p149, %p150
      %p153 = scmp.ne.s32.totalorder %s136, %s152
      %p154 = scmp.eq.s32.totalorder %s27, 0
      %p155 = por %p153, %p154
      %s156 = ssub.s32 %s29, %s36
      %p157 = scmp.eq.s32.totalorder %s156, 0
      %s159 = sadd.s32 %s158, 1
      %s160 = scalar_select %p157, %s158, %s159
      %p163 = pneg %p157
      %p164 = scmp.eq.s32.totalorder %s21, 3
      %p165 = por %p163, %p164
      %p166 = scmp.ne.s32.totalorder %s158, %s161
      %p167 = scmp.eq.s32.totalorder %s21, 0
      %p168 = por %p166, %p167
      %p169 = scmp.ne.s32.totalorder %s158, %s161
      %p170 = scmp.eq.s32.totalorder %s26, 3
      %p171 = por %p169, %p170
      %p172 = scmp.ne.s32.totalorder %s161, %s162
      %p173 = scmp.eq.s32.totalorder %s26, 0
      %p174 = por %p172, %p173
      %p175 = scmp.ne.s32.totalorder %s161, %s162
      %p176 = scmp.eq.s32.totalorder %s27, 3
      %p177 = por %p175, %p176
      %p179 = scmp.ne.s32.totalorder %s162, %s178
      %p180 = scmp.eq.s32.totalorder %s27, 0
      %p181 = por %p179, %p180
      %s182 = ssub.s32 %s29, %s36
      %p183 = scmp.eq.s32.totalorder %s182, 0
      %s185 = sadd.s32 %s184, 1
      %s186 = scalar_select %p183, %s184, %s185
      %p189 = pneg %p183
      %p190 = scmp.eq.s32.totalorder %s21, 3
      %p191 = por %p189, %p190
      %p192 = scmp.ne.s32.totalorder %s184, %s187
      %p193 = scmp.eq.s32.totalorder %s21, 0
      %p194 = por %p192, %p193
      %p195 = scmp.ne.s32.totalorder %s184, %s187
      %p196 = scmp.eq.s32.totalorder %s26, 3
      %p197 = por %p195, %p196
      %p198 = scmp.ne.s32.totalorder %s187, %s188
      %p199 = scmp.eq.s32.totalorder %s26, 0
      %p200 = por %p198, %p199
      %p201 = scmp.ne.s32.totalorder %s187, %s188
      %p202 = scmp.eq.s32.totalorder %s27, 3
      %p203 = por %p201, %p202
      %p205 = scmp.ne.s32.totalorder %s188, %s204
      %p206 = scmp.eq.s32.totalorder %s27, 0
      %p207 = por %p205, %p206
      %s208 = ssub.s32 %s29, %s36
      %p209 = scmp.eq.s32.totalorder %s208, 0
      %s211 = sadd.s32 %s210, 1
      %s212 = scalar_select %p209, %s210, %s211
      %p215 = pneg %p209
      %p216 = scmp.eq.s32.totalorder %s21, 3
      %p217 = por %p215, %p216
      %p218 = scmp.ne.s32.totalorder %s210, %s213
      %p219 = scmp.eq.s32.totalorder %s21, 0
      %p220 = por %p218, %p219
      %p221 = scmp.ne.s32.totalorder %s210, %s213
      %p222 = scmp.eq.s32.totalorder %s26, 3
      %p223 = por %p221, %p222
      %p224 = scmp.ne.s32.totalorder %s213, %s214
      %p225 = scmp.eq.s32.totalorder %s26, 0
      %p226 = por %p224, %p225
      %p227 = scmp.ne.s32.totalorder %s213, %s214
      %p228 = scmp.eq.s32.totalorder %s27, 3
      %p229 = por %p227, %p228
      %p231 = scmp.ne.s32.totalorder %s214, %s230
      %p232 = scmp.eq.s32.totalorder %s27, 0
      %p233 = por %p231, %p232
      %s234 = ssub.s32 %s29, %s36
      %p235 = scmp.eq.s32.totalorder %s234, 0
      %s237 = sadd.s32 %s236, 1
      %s238 = scalar_select %p235, %s236, %s237
      %p241 = pneg %p235
      %p242 = scmp.eq.s32.totalorder %s21, 3
      %p243 = por %p241, %p242
      %p244 = scmp.ne.s32.totalorder %s236, %s239
      %p245 = scmp.eq.s32.totalorder %s21, 0
      %p246 = por %p244, %p245
      %p247 = scmp.ne.s32.totalorder %s236, %s239
      %p248 = scmp.eq.s32.totalorder %s26, 3
      %p249 = por %p247, %p248
      %p250 = scmp.ne.s32.totalorder %s239, %s240
      %p251 = scmp.eq.s32.totalorder %s26, 0
      %p252 = por %p250, %p251
      %p253 = scmp.ne.s32.totalorder %s239, %s240
      %p254 = scmp.eq.s32.totalorder %s27, 3
      %p255 = por %p253, %p254
      %p257 = scmp.ne.s32.totalorder %s240, %s256
      %p258 = scmp.eq.s32.totalorder %s27, 0
      %p259 = por %p257, %p258
      %s260 = ssub.s32 %s29, %s36
      %p261 = scmp.eq.s32.totalorder %s260, 0
      %s263 = sadd.s32 %s262, 1
      %s264 = scalar_select %p261, %s262, %s263
      %p267 = pneg %p261
      %p268 = scmp.eq.s32.totalorder %s21, 3
      %p269 = por %p267, %p268
      %p270 = scmp.ne.s32.totalorder %s262, %s265
      %p271 = scmp.eq.s32.totalorder %s21, 0
      %p272 = por %p270, %p271
      %p273 = scmp.ne.s32.totalorder %s262, %s265
      %p274 = scmp.eq.s32.totalorder %s26, 3
      %p275 = por %p273, %p274
      %p276 = scmp.ne.s32.totalorder %s265, %s266
      %p277 = scmp.eq.s32.totalorder %s26, 0
      %p278 = por %p276, %p277
      %p279 = scmp.ne.s32.totalorder %s265, %s266
      %p280 = scmp.eq.s32.totalorder %s27, 3
      %p281 = por %p279, %p280
      %p283 = scmp.ne.s32.totalorder %s266, %s282
      %p284 = scmp.eq.s32.totalorder %s27, 0
      %p285 = por %p283, %p284
      %s287 = sadd.s32 %s286, 1
      %p290 = scmp.eq.s32.totalorder %s21, 3
      %p291 = scmp.ne.s32.totalorder %s286, %s288
      %p292 = scmp.eq.s32.totalorder %s21, 0
      %p293 = por %p291, %p292
      %p294 = scmp.ne.s32.totalorder %s286, %s288
      %p295 = scmp.eq.s32.totalorder %s26, 3
      %p296 = por %p294, %p295
      %p297 = scmp.ne.s32.totalorder %s288, %s289
      %p298 = scmp.eq.s32.totalorder %s26, 0
      %p299 = por %p297, %p298
      %p300 = scmp.ne.s32.totalorder %s288, %s289
      %p301 = scmp.eq.s32.totalorder %s27, 3
      %p302 = por %p300, %p301
      %p304 = scmp.ne.s32.totalorder %s289, %s303
      %p305 = scmp.eq.s32.totalorder %s27, 0
      %p306 = por %p304, %p305
      %s308 = sadd.s32 %s307, 1
      %p311 = scmp.eq.s32.totalorder %s21, 3
      %p312 = scmp.ne.s32.totalorder %s307, %s309
      %p313 = scmp.eq.s32.totalorder %s21, 0
      %p314 = por %p312, %p313
      %p315 = scmp.ne.s32.totalorder %s307, %s309
      %p316 = scmp.eq.s32.totalorder %s26, 3
      %p317 = por %p315, %p316
      %p318 = scmp.ne.s32.totalorder %s309, %s310
      %p319 = scmp.eq.s32.totalorder %s26, 0
      %p320 = por %p318, %p319
      %p321 = scmp.ne.s32.totalorder %s309, %s310
      %p322 = scmp.eq.s32.totalorder %s27, 3
      %p323 = por %p321, %p322
      %p325 = scmp.ne.s32.totalorder %s310, %s324
      %p326 = scmp.eq.s32.totalorder %s27, 0
      %p327 = por %p325, %p326
      %s328 = ssub.s32 %s28, %s40
      %p329 = scmp.eq.s32.totalorder %s328, 0
      %s331 = sadd.s32 %s330, 1
      %s332 = scalar_select %p329, %s330, %s331
      %p335 = pneg %p329
      %p336 = scmp.eq.s32.totalorder %s21, 3
      %p337 = por %p335, %p336
      %p338 = scmp.ne.s32.totalorder %s330, %s333
      %p339 = scmp.eq.s32.totalorder %s21, 0
      %p340 = por %p338, %p339
      %p341 = scmp.ne.s32.totalorder %s330, %s333
      %p342 = scmp.eq.s32.totalorder %s26, 3
      %p343 = por %p341, %p342
      %p344 = scmp.ne.s32.totalorder %s333, %s334
      %p345 = scmp.eq.s32.totalorder %s26, 0
      %p346 = por %p344, %p345
      %p347 = scmp.ne.s32.totalorder %s333, %s334
      %p348 = scmp.eq.s32.totalorder %s27, 3
      %p349 = por %p347, %p348
      %p351 = scmp.ne.s32.totalorder %s334, %s350
      %p352 = scmp.eq.s32.totalorder %s27, 0
      %p353 = por %p351, %p352
      %p354 = scmp.le.s32.totalorder 1, %s21
      %p355 = scmp.lt.s32.totalorder %s21, 5
      %p356 = pnand %p354, %p355
      %p357 = pneg %p356
      // Predicated region
      $region9: #{tpu_custom_call.1} parent=5 // pred_check
        _
      $region10: #{tpu_custom_call.1} parent=5 // pred_check_branch
        %359 = sbr.rel (%p356) target = $region12
      $region11: #{tpu_custom_call.1} parent=5 // pred_region
        %s360 = ssub.s32 %s21, 1
        // Predicated region
        $region13: #{tpu_custom_call.1} parent=11 // pred_check
          %p361 = pneg %p80
        $region14: #{tpu_custom_call.1} parent=11 // pred_check_branch
          %363 = sbr.rel (%p361) target = $region16
        $region15: #{tpu_custom_call.1} parent=11 // pred_region
          _
        $region16: #{tpu_custom_call.1} parent=11 // pred_fallthru
          _
        // Predicated region
        $region17: #{tpu_custom_call.1} parent=11 // pred_check
          %p364 = pneg %p101
        $region18: #{tpu_custom_call.1} parent=11 // pred_check_branch
          %366 = sbr.rel (%p364) target = $region20
        $region19: #{tpu_custom_call.1} parent=11 // pred_region
          _
        $region20: #{tpu_custom_call.1} parent=11 // pred_fallthru
          _
        // Predicated region
        $region21: #{tpu_custom_call.1} parent=11 // pred_check
          %p367 = pneg %p122
        $region22: #{tpu_custom_call.1} parent=11 // pred_check_branch
          %369 = sbr.rel (%p367) target = $region24
        $region23: #{tpu_custom_call.1} parent=11 // pred_region
          _
        $region24: #{tpu_custom_call.1} parent=11 // pred_fallthru
          _
        // Predicated region
        $region25: #{tpu_custom_call.1} parent=11 // pred_check
          %p370 = pneg %p299
        $region26: #{tpu_custom_call.1} parent=11 // pred_check_branch
          %372 = sbr.rel (%p370) target = $region28
        $region27: #{tpu_custom_call.1} parent=11 // pred_region
          _
        $region28: #{tpu_custom_call.1} parent=11 // pred_fallthru
          _
        // Predicated region
        $region29: #{tpu_custom_call.1} parent=11 // pred_check
          %p373 = pneg %p320
        $region30: #{tpu_custom_call.1} parent=11 // pred_check_branch
          %375 = sbr.rel (%p373) target = $region32
        $region31: #{tpu_custom_call.1} parent=11 // pred_region
          _
        $region32: #{tpu_custom_call.1} parent=11 // pred_fallthru
          _
      $region12: #{tpu_custom_call.1} parent=5 // pred_fallthru
        _
      %p376 = scmp.lt.s32.totalorder %s21, 4
      // Predicated region
      $region33: #{tpu_custom_call.1} parent=5 // pred_check
        %p377 = pneg %p376
      $region34: #{tpu_custom_call.1} parent=5 // pred_check_branch
        %379 = sbr.rel (%p377) target = $region36
      $region35: #{tpu_custom_call.1} parent=5 // pred_region
        // Predicated region
        $region37: #{tpu_custom_call.1} parent=35 // pred_check
          %p380 = pneg %p53
        $region38: #{tpu_custom_call.1} parent=35 // pred_check_branch
          %382 = sbr.rel (%p380) target = $region40
        $region39: #{tpu_custom_call.1} parent=35 // pred_region
          %p383 = scmp.lt.s32.totalorder %s28, 1
          %s384 = scalar_select %p383, %s28, 1
          %s385 = smul.addr %s384, 3
          %s386 = smul.addr %s385, 4
          %s387 = scalar_lea.vmem %s0, %s386
        $region40: #{tpu_custom_call.1} parent=35 // pred_fallthru
          _
        // Predicated region
        $region41: #{tpu_custom_call.1} parent=35 // pred_check
          %p388 = pneg %p142
        $region42: #{tpu_custom_call.1} parent=35 // pred_check_branch
          %390 = sbr.rel (%p388) target = $region44
        $region43: #{tpu_custom_call.1} parent=35 // pred_region
          %p391 = scmp.lt.s32.totalorder %s29, 1
          %s392 = scalar_select %p391, %s29, 1
          %s393 = smul.addr %s392, 2
          %s394 = smul.addr %s393, 8
          %s395 = scalar_lea.vmem %s4, %s394
        $region44: #{tpu_custom_call.1} parent=35 // pred_fallthru
          _
        // Predicated region
        $region45: #{tpu_custom_call.1} parent=35 // pred_check
          %p396 = pneg %p168
        $region46: #{tpu_custom_call.1} parent=35 // pred_check_branch
          %398 = sbr.rel (%p396) target = $region48
        $region47: #{tpu_custom_call.1} parent=35 // pred_region
          %p399 = scmp.lt.s32.totalorder %s29, 1
          %s400 = scalar_select %p399, %s29, 1
          %s401 = smul.addr %s400, 4
          %s402 = smul.addr %s401, 4
          %s403 = scalar_lea.vmem %s5, %s402
        $region48: #{tpu_custom_call.1} parent=35 // pred_fallthru
          _
        // Predicated region
        $region49: #{tpu_custom_call.1} parent=35 // pred_check
          %p404 = pneg %p194
        $region50: #{tpu_custom_call.1} parent=35 // pred_check_branch
          %406 = sbr.rel (%p404) target = $region52
        $region51: #{tpu_custom_call.1} parent=35 // pred_region
          %p407 = scmp.lt.s32.totalorder %s29, 1
          %s408 = scalar_select %p407, %s29, 1
          %s409 = smul.addr %s408, 4
          %s410 = smul.addr %s409, 4
          %s411 = scalar_lea.vmem %s6, %s410
        $region52: #{tpu_custom_call.1} parent=35 // pred_fallthru
          _
        // Predicated region
        $region53: #{tpu_custom_call.1} parent=35 // pred_check
          %p412 = pneg %p220
        $region54: #{tpu_custom_call.1} parent=35 // pred_check_branch
          %414 = sbr.rel (%p412) target = $region56
        $region55: #{tpu_custom_call.1} parent=35 // pred_region
          %p415 = scmp.lt.s32.totalorder %s29, 1
          %s416 = scalar_select %p415, %s29, 1
          %s417 = smul.addr %s416, 4
          %s418 = smul.addr %s417, 4
          %s419 = scalar_lea.vmem %s7, %s418
        $region56: #{tpu_custom_call.1} parent=35 // pred_fallthru
          _
        // Predicated region
        $region57: #{tpu_custom_call.1} parent=35 // pred_check
          %p420 = pneg %p246
        $region58: #{tpu_custom_call.1} parent=35 // pred_check_branch
          %422 = sbr.rel (%p420) target = $region60
        $region59: #{tpu_custom_call.1} parent=35 // pred_region
          %p423 = scmp.lt.s32.totalorder %s29, 1
          %s424 = scalar_select %p423, %s29, 1
          %s425 = scalar_lea.vmem %s8, %s424
        $region60: #{tpu_custom_call.1} parent=35 // pred_fallthru
          _
        // Predicated region
        $region61: #{tpu_custom_call.1} parent=35 // pred_check
          %p426 = pneg %p272
        $region62: #{tpu_custom_call.1} parent=35 // pred_check_branch
          %428 = sbr.rel (%p426) target = $region64
        $region63: #{tpu_custom_call.1} parent=35 // pred_region
          %p429 = scmp.lt.s32.totalorder %s29, 1
          %s430 = scalar_select %p429, %s29, 1
          %s431 = smul.addr %s430, 16
          %s432 = smul.addr %s431, 4
          %s433 = scalar_lea.vmem %s9, %s432
        $region64: #{tpu_custom_call.1} parent=35 // pred_fallthru
          _
      $region36: #{tpu_custom_call.1} parent=5 // pred_fallthru
        _
      %p434 = scmp.le.s32.totalorder 1, %s21
      %p435 = scmp.lt.s32.totalorder %s21, 5
      %p436 = pnand %p434, %p435
      %p437 = pneg %p436
      // Predicated region
      $region65: #{tpu_custom_call.1} parent=5 // pred_check
        _
      $region66: #{tpu_custom_call.1} parent=5 // pred_check_branch
        %439 = sbr.rel (%p436) target = $region68
      $region67: #{tpu_custom_call.1} parent=5 // pred_region
        %s440 = ssub.s32 %s21, 1
        %p441 = scmp.lt.s32.totalorder %s30, 1
        %s442 = scalar_select %p441, %s30, 1
        %s443 = smul.addr %s442, 3
        %s444 = smul.addr %s443, 4
        %s445 = scalar_lea.vmem %s0, %s444
        %p446 = pneg %p59
        %p447 = pneg %p56
        %p448 = pneg %p80
        %p449 = pneg %p77
        %p450 = pneg %p101
        %p451 = pneg %p98
        %p452 = pneg %p122
        %p453 = pneg %p119
        %p454 = scmp.lt.s32.totalorder %s31, 1
        %s455 = scalar_select %p454, %s31, 1
        %s456 = smul.addr %s455, 2
        %s457 = smul.addr %s456, 8
        %s458 = scalar_lea.vmem %s4, %s457
        %p459 = pneg %p148
        %p460 = pneg %p145
        %p461 = scmp.lt.s32.totalorder %s31, 1
        %s462 = scalar_select %p461, %s31, 1
        %s463 = smul.addr %s462, 4
        %s464 = smul.addr %s463, 4
        %s465 = scalar_lea.vmem %s5, %s464
        %p466 = pneg %p174
        %p467 = pneg %p171
        %p468 = scmp.lt.s32.totalorder %s31, 1
        %s469 = scalar_select %p468, %s31, 1
        %s470 = smul.addr %s469, 4
        %s471 = smul.addr %s470, 4
        %s472 = scalar_lea.vmem %s6, %s471
        %p473 = pneg %p200
        %p474 = pneg %p197
        %p475 = scmp.lt.s32.totalorder %s31, 1
        %s476 = scalar_select %p475, %s31, 1
        %s477 = smul.addr %s476, 4
        %s478 = smul.addr %s477, 4
        %s479 = scalar_lea.vmem %s7, %s478
        %p480 = pneg %p226
        %p481 = pneg %p223
        %p482 = scmp.lt.s32.totalorder %s31, 1
        %s483 = scalar_select %p482, %s31, 1
        %s484 = scalar_lea.vmem %s8, %s483
        %p485 = pneg %p252
        %p486 = pneg %p249
        %p487 = scmp.lt.s32.totalorder %s31, 1
        %s488 = scalar_select %p487, %s31, 1
        %s489 = smul.addr %s488, 16
        %s490 = smul.addr %s489, 4
        %s491 = scalar_lea.vmem %s9, %s490
        %p492 = pneg %p278
        %p493 = pneg %p275
        %p494 = pneg %p299
        %p495 = pneg %p296
        %p496 = pneg %p320
        %p497 = pneg %p317
        %p498 = pneg %p346
        %p499 = pneg %p343
        %s500 = sand.u32 %s333, 1
        %s501 = scalar_lea.sflag [#allocation4], %s500
        %s502 = sand.u32 %s333, 1
        %s503 = scalar_lea.vmem [#allocation3], %s502
        %p504 = scmp.lt.s32.totalorder %s30, 1
        %s505 = scalar_select %p504, %s30, 1
        %s506 = smul.addr %s505, 3
        %s507 = smul.addr %s506, 4
        %s508 = scalar_lea.vmem %s0, %s507
        %p509 = scmp.lt.s32.totalorder %s31, 1
        %s510 = scalar_select %p509, %s31, 1
        %s511 = smul.addr %s510, 2
        %s512 = smul.addr %s511, 8
        %s513 = scalar_lea.vmem %s4, %s512
        %p514 = scmp.lt.s32.totalorder %s31, 1
        %s515 = scalar_select %p514, %s31, 1
        %s516 = smul.addr %s515, 4
        %s517 = smul.addr %s516, 4
        %s518 = scalar_lea.vmem %s5, %s517
        %p519 = scmp.lt.s32.totalorder %s31, 1
        %s520 = scalar_select %p519, %s31, 1
        %s521 = smul.addr %s520, 4
        %s522 = smul.addr %s521, 4
        %s523 = scalar_lea.vmem %s6, %s522
        %p524 = scmp.lt.s32.totalorder %s31, 1
        %s525 = scalar_select %p524, %s31, 1
        %s526 = smul.addr %s525, 4
        %s527 = smul.addr %s526, 4
        %s528 = scalar_lea.vmem %s7, %s527
        %p529 = scmp.lt.s32.totalorder %s31, 1
        %s530 = scalar_select %p529, %s31, 1
        %s531 = scalar_lea.vmem %s8, %s530
        %p532 = scmp.lt.s32.totalorder %s31, 1
        %s533 = scalar_select %p532, %s31, 1
        %s534 = smul.addr %s533, 16
        %s535 = smul.addr %s534, 4
        %s536 = scalar_lea.vmem %s9, %s535
        %p538 = scmp.eq.s32.totalorder %s31, 0
        // Predicated region
        $region69: #{tpu_custom_call.1} parent=67 // pred_check
          %p539 = pneg %p538
        $region70: #{tpu_custom_call.1} parent=67 // pred_check_branch
          %541 = sbr.rel (%p539) target = $region72
        $region71: #{tpu_custom_call.1} parent=67 // pred_region
          %v542 = vld [vmem:[%s508] sm:$0xf]
          %v543 = vld [vmem:[%s508 + $0x4] sm:$0xf]
          %v544 = vld [vmem:[%s508 + $0x8] sm:$0xf]
          %v545 = vld [vmem:[%s1] sm:$0xf]
          %v546 = vld [vmem:[%s1 + $0x4] sm:$0xf]
          %v547 = vld [vmem:[%s1 + $0x8] sm:$0xf]
          %v548 = vld [vmem:[%s1 + $0xc] sm:$0xf]
          %v549 = vld [vmem:[%s1 + $0x10] sm:$0xf]
          %v550 = vld [vmem:[%s1 + $0x14] sm:$0xf]
          %v554 = vunpack.c.l.b16 %v542
          %v555 = vunpack.c.l.b16 %v543
          %v556 = vunpack.c.l.b16 %v544
          %v557 = vpack.c.b16 %v555, %v554
          %v558 = vpack.c.b16 %v556, %v556
          %v565 = vunpack.c.l.b16 %v545
          %v566 = vunpack.c.l.b16 %v546
          %v567 = vunpack.c.l.b16 %v547
          %v568 = vunpack.c.l.b16 %v548
          %v569 = vunpack.c.l.b16 %v549
          %v570 = vunpack.c.l.b16 %v550
          %v571 = vpack.c.b16 %v566, %v565
          %v572 = vpack.c.b16 %v568, %v567
          %v573 = vpack.c.b16 %v570, %v569
          %vm577 = vcmask 392192
          %v579 = vsel %vm577, %v557, 0
          %v582 = vsel %vm577, %v558, 0
          %584 = vmatprep.subr.bf16.mxu0 0
          %585 = vmatpush1.bf16.msra.mxu0 0
          %586 = vmatprep.subr.bf16.mxu0 0
          %587 = vmatpush1.bf16.msra.mxu0 0
          %588 = vmatprep.subr.bf16.mxu0 0
          %589 = vmatpush1.bf16.msra.mxu0 0
          %590 = vmatprep.subr.bf16.mxu0 0
          %591 = vmatpush1.bf16.msra.mxu0 0
          %592 = vmatprep.subr.bf16.mxu0 0
          %593 = vmatpush1.bf16.msra.mxu0 0
          %594 = vmatprep.subr.bf16.mxu0 0
          %595 = vmatpush1.bf16.msra.mxu0 %v573
          %596 = vmatprep.subr.bf16.mxu0 0
          %597 = vmatpush1.bf16.msra.mxu0 %v572
          %598 = vmatprep.subr.bf16.mxu0 0
          %599 = vmatpush1.bf16.msra.mxu0 %v571
          %600 = vmatprep.subr.bf16.mxu0 0
          %601 = vmatpush2.bf16.msra.mxu0 0
          %602 = vmatprep.subr.bf16.mxu0 0
          %603 = vmatpush2.bf16.msra.mxu0 0
          %604 = vmatprep.subr.bf16.mxu0 0
          %605 = vmatpush2.bf16.msra.mxu0 0
          %606 = vmatprep.subr.bf16.mxu0 0
          %607 = vmatpush2.bf16.msra.mxu0 0
          %608 = vmatprep.subr.bf16.mxu0 0
          %609 = vmatpush2.bf16.msra.mxu0 0
          %610 = vmatprep.subr.bf16.mxu0 0
          %611 = vmatpush2.bf16.msra.mxu0 0
          %612 = vmatprep.subr.bf16.mxu0 0
          %613 = vmatpush2.bf16.msra.mxu0 0
          %614 = vmatprep.subr.bf16.mxu0 0
          %615 = vmatpush2.bf16.msra.mxu0 0
          %616 = vmatprep.mubr.bf16.mxu0 0
          %617 = vmatmul.mubr.bf16.gmra.mxu0 %v579
          %v618 = vpop.f32.mrf.mxu0
          %v619 = vadd.f32 0.0, %v618
          %v620 = vpop.f32.mrf.mxu0
          %v621 = vpop.f32.mrf.mxu0
          %v622 = vadd.f32 0.0, %v621
          %v623 = vpop.f32.mrf.mxu0
          %624 = vmatprep.mubr.bf16.mxu0 0
          %625 = vmatmul.mubr.bf16.gmra.mxu0 %v582
          %v626 = vpop.f32.mrf.mxu0
          %v627 = vadd.f32 0.0, %v626
          %v628 = vpop.f32.mrf.mxu0
          %v629 = vpop.f32.mrf.mxu0
          %v630 = vpop.f32.mrf.mxu0
          %631 = vdwg.mxu0
          %v632 = vld [vmem:[%s2] sm:$0xff]
          %v633 = vld [vmem:[%s2 + $0x8] sm:$0xff]
          %v634 = vld [vmem:[%s2 + $0x10] sm:$0xff]
          %v635 = vadd.f32 %v619, %v632
          %v636 = vadd.f32 %v622, %v633
          %v637 = vadd.f32 %v627, %v634
          %v638 = vld [vmem:[%s3] sm:$0x1]
          %v639 = vld [vmem:[%s3 + $0x1] sm:$0x1]
          %vm640 = vcmask 261120
          %v641 = vsel %vm640, %v635, 0.0
          %642 = vadd.xlane.f32.xlu0 %v641
          %v643 = vpop.xlane.xlu0 %642
          %v644 = vsel %vm640, %v636, 0.0
          %645 = vadd.xlane.f32.xlu0 %v644
          %v646 = vpop.xlane.xlu0 %645
          %v647 = vsel %vm640, %v637, 0.0
          %648 = vadd.xlane.f32.xlu0 %v647
          %v649 = vpop.xlane.xlu0 %648
          %v650 = vrcp.pop 32.0
          %v651 = vmul.f32 %v643, %v650
          %v652 = vmul.f32 %v646, %v650
          %v653 = vmul.f32 %v649, %v650
          %v654 = vsub.f32 %v635, %v651
          %v655 = vsub.f32 %v636, %v652
          %v656 = vsub.f32 %v637, %v653
          %v657 = vmul.f32 %v654, %v654
          %v658 = vmul.f32 %v655, %v655
          %v659 = vmul.f32 %v656, %v656
          %v660 = vsel %vm640, %v657, 0.0
          %661 = vadd.xlane.f32.xlu0 %v660
          %v662 = vpop.xlane.xlu0 %661
          %v663 = vsel %vm640, %v658, 0.0
          %664 = vadd.xlane.f32.xlu0 %v663
          %v665 = vpop.xlane.xlu0 %664
          %v666 = vsel %vm640, %v659, 0.0
          %667 = vadd.xlane.f32.xlu0 %v666
          %v668 = vpop.xlane.xlu0 %667
          %v669 = vmul.f32 %v662, %v650
          %v670 = vmul.f32 %v665, %v650
          %v671 = vmul.f32 %v668, %v650
          %v672 = vadd.f32 %v669, 1e-05
          %v673 = vadd.f32 %v670, 1e-05
          %v674 = vadd.f32 %v671, 1e-05
          %v675 = vrsqrt.pop %v672
          %v676 = vrsqrt.pop %v673
          %v677 = vrsqrt.pop %v674
          %v678 = vmul.f32 %v654, %v675
          %v679 = vmul.f32 %v655, %v676
          %v680 = vmul.f32 %v656, %v677
          %v681 = vlaneseq
          %v682 = vshrl.u32 %v681, 7
          %v683 = vsub.s32 0, %v682
          %v684 = vrot.slane %v638, %v683
          %v685 = vmul.f32 %v678, %v684
          %v686 = vmul.f32 %v679, %v684
          %v687 = vmul.f32 %v680, %v684
          %v688 = vlaneseq
          %v689 = vshrl.u32 %v688, 7
          %v690 = vsub.s32 0, %v689
          %v691 = vrot.slane %v639, %v690
          %v692 = vadd.f32 %v685, %v691
          %v693 = vadd.f32 %v686, %v691
          %v694 = vadd.f32 %v687, %v691
          %695 = vst.msk [vmem:[#allocation2] sm:$0xff] %vm640, %v692
          %696 = vst.msk [vmem:[#allocation2 + $0x8] sm:$0xff] %vm640, %v693
          %697 = vst.msk [vmem:[#allocation2 + $0x10] sm:$0xff] %vm640, %v694
        $region72: #{tpu_custom_call.1} parent=67 // pred_fallthru
          _
        %v698 = vld [vmem:[#allocation2] sm:$0xff]
        %v699 = vld [vmem:[#allocation2 + $0x8] sm:$0xff]
        %v700 = vld [vmem:[#allocation2 + $0x10] sm:$0xff]
        %v701 = vld [vmem:[%s513] sm:$0xff]
        %v702 = vld [vmem:[%s513 + $0x8] sm:$0x1]
        %vm703 = vcmask 261120
        %v704 = vsel %vm703, %v698, 0.0
        %705 = vadd.xlane.f32.xlu0 %v704
        %v706 = vpop.xlane.xlu0 %705
        %v707 = vsel %vm703, %v699, 0.0
        %708 = vadd.xlane.f32.xlu0 %v707
        %v709 = vpop.xlane.xlu0 %708
        %v710 = vsel %vm703, %v700, 0.0
        %711 = vadd.xlane.f32.xlu0 %v710
        %v712 = vpop.xlane.xlu0 %711
        %v713 = vrcp.pop 32.0
        %v714 = vmul.f32 %v706, %v713
        %v715 = vmul.f32 %v709, %v713
        %v716 = vmul.f32 %v712, %v713
        %v717 = vsub.f32 %v698, %v714
        %v718 = vsub.f32 %v699, %v715
        %v719 = vsub.f32 %v700, %v716
        %v720 = vmul.f32 %v717, %v717
        %v721 = vmul.f32 %v718, %v718
        %v722 = vmul.f32 %v719, %v719
        %v723 = vsel %vm703, %v720, 0.0
        %724 = vadd.xlane.f32.xlu0 %v723
        %v725 = vpop.xlane.xlu0 %724
        %v726 = vsel %vm703, %v721, 0.0
        %727 = vadd.xlane.f32.xlu0 %v726
        %v728 = vpop.xlane.xlu0 %727
        %v729 = vsel %vm703, %v722, 0.0
        %730 = vadd.xlane.f32.xlu0 %v729
        %v731 = vpop.xlane.xlu0 %730
        %v732 = vmul.f32 %v725, %v713
        %v733 = vmul.f32 %v728, %v713
        %v734 = vmul.f32 %v731, %v713
        %v735 = vadd.f32 %v732, 1e-05
        %v736 = vadd.f32 %v733, 1e-05
        %v737 = vadd.f32 %v734, 1e-05
        %v738 = vrsqrt.pop %v735
        %v739 = vrsqrt.pop %v736
        %v740 = vrsqrt.pop %v737
        %v741 = vmul.f32 %v717, %v738
        %v742 = vmul.f32 %v718, %v739
        %v743 = vmul.f32 %v719, %v740
        %v744 = vlaneseq
        %v745 = vshrl.u32 %v744, 7
        %v746 = vsub.s32 0, %v745
        %v747 = vrot.slane %v701, %v746
        %v748 = vmul.f32 %v741, %v747
        %v749 = vmul.f32 %v742, %v747
        %v750 = vmul.f32 %v743, %v747
        %v751 = vlaneseq
        %v752 = vshrl.u32 %v751, 7
        %v753 = vsub.s32 1, %v752
        %v754 = vrot.slane %v701, %v753
        %v755 = vadd.f32 %v748, %v754
        %v756 = vadd.f32 %v749, %v754
        %v757 = vadd.f32 %v750, %v754
        %v758 = vpack.c.bf16 %v756, %v755
        %v759 = vpack.c.bf16 %v757, %v757
        %v760 = vld [vmem:[%s518] sm:$0xf]
        %v761 = vld [vmem:[%s518 + $0x4] sm:$0xf]
        %v762 = vld [vmem:[%s518 + $0x8] sm:$0xf]
        %v763 = vld [vmem:[%s518 + $0xc] sm:$0xf]
        %v768 = vunpack.c.l.b16 %v760
        %v769 = vunpack.c.l.b16 %v761
        %v770 = vunpack.c.l.b16 %v762
        %v771 = vunpack.c.l.b16 %v763
        %v772 = vpack.c.b16 %v769, %v768
        %v773 = vpack.c.b16 %v771, %v770
        %v777 = vsel %vm703, %v758, 0
        %v780 = vsel %vm703, %v759, 0
        %782 = vmatprep.subr.bf16.mxu0 0
        %783 = vmatpush1.bf16.msra.mxu0 0
        %784 = vmatprep.subr.bf16.mxu0 0
        %785 = vmatpush1.bf16.msra.mxu0 0
        %786 = vmatprep.subr.bf16.mxu0 0
        %787 = vmatpush1.bf16.msra.mxu0 0
        %788 = vmatprep.subr.bf16.mxu0 0
        %789 = vmatpush1.bf16.msra.mxu0 0
        %790 = vmatprep.subr.bf16.mxu0 0
        %791 = vmatpush1.bf16.msra.mxu0 0
        %792 = vmatprep.subr.bf16.mxu0 0
        %793 = vmatpush1.bf16.msra.mxu0 0
        %794 = vmatprep.subr.bf16.mxu0 0
        %795 = vmatpush1.bf16.msra.mxu0 %v773
        %796 = vmatprep.subr.bf16.mxu0 0
        %797 = vmatpush1.bf16.msra.mxu0 %v772
        %798 = vmatprep.subr.bf16.mxu0 0
        %799 = vmatpush2.bf16.msra.mxu0 0
        %800 = vmatprep.subr.bf16.mxu0 0
        %801 = vmatpush2.bf16.msra.mxu0 0
        %802 = vmatprep.subr.bf16.mxu0 0
        %803 = vmatpush2.bf16.msra.mxu0 0
        %804 = vmatprep.subr.bf16.mxu0 0
        %805 = vmatpush2.bf16.msra.mxu0 0
        %806 = vmatprep.subr.bf16.mxu0 0
        %807 = vmatpush2.bf16.msra.mxu0 0
        %808 = vmatprep.subr.bf16.mxu0 0
        %809 = vmatpush2.bf16.msra.mxu0 0
        %810 = vmatprep.subr.bf16.mxu0 0
        %811 = vmatpush2.bf16.msra.mxu0 0
        %812 = vmatprep.subr.bf16.mxu0 0
        %813 = vmatpush2.bf16.msra.mxu0 0
        %814 = vmatprep.mubr.bf16.mxu0 0
        %815 = vmatmul.mubr.bf16.gmra.mxu0 %v777
        %v816 = vpop.f32.mrf.mxu0
        %v817 = vadd.f32 0.0, %v816
        %v818 = vpop.f32.mrf.mxu0
        %v819 = vpop.f32.mrf.mxu0
        %v820 = vadd.f32 0.0, %v819
        %v821 = vpop.f32.mrf.mxu0
        %822 = vmatprep.mubr.bf16.mxu0 0
        %823 = vmatmul.mubr.bf16.gmra.mxu0 %v780
        %v824 = vpop.f32.mrf.mxu0
        %v825 = vadd.f32 0.0, %v824
        %v826 = vpop.f32.mrf.mxu0
        %v827 = vpop.f32.mrf.mxu0
        %v828 = vpop.f32.mrf.mxu0
        %829 = vdwg.mxu0
        %v830 = vlaneseq
        %v831 = vshrl.u32 %v830, 7
        %v832 = vsub.s32 4, %v831
        %v833 = vrot.slane %v701, %v832
        %v834 = vadd.f32 %v817, %v833
        %v835 = vadd.f32 %v820, %v833
        %v836 = vadd.f32 %v825, %v833
        %v837 = vlaneseq
        %v838 = vshrl.u32 %v837, 7
        %v839 = vsub.s32 5, %v838
        %v840 = vrot.slane %v701, %v839
        %842 = vrot.lane.b32.xlu0 %v840, 32
        %v843 = vpop.permute.xlu0 %842
        %v845 = vadd.f32 %v817, %v843
        %v846 = vadd.f32 %v820, %v843
        %v847 = vadd.f32 %v825, %v843
        %v848 = vlaneseq
        %v849 = vshrl.u32 %v848, 7
        %v850 = vsub.s32 6, %v849
        %v851 = vrot.slane %v701, %v850
        %853 = vrot.lane.b32.xlu0 %v851, 64
        %v854 = vpop.permute.xlu0 %853
        %v856 = vadd.f32 %v817, %v854
        %v857 = vadd.f32 %v820, %v854
        %v858 = vadd.f32 %v825, %v854
        %v859 = vpack.c.bf16 %v857, %v856
        %v860 = vpack.c.bf16 %v858, %v858
        %v861 = vlaneseq
        %v862 = vand.u32 %v861, 127
        %vm863 = vcmp.lt.s32.totalorder %v862, 17
        %v864 = vsel %vm863, 0.0, -1e+30
        %v865 = vlaneseq
        %v866 = vshrl.u32 %v865, 7
        %v867 = vsub.s32 7, %v866
        %v868 = vrot.slane %v701, %v867
        %v869 = vadd.f32 %v698, %v868
        %v870 = vadd.f32 %v699, %v868
        %v871 = vadd.f32 %v700, %v868
        %v872 = vpack.c.bf16 %v835, %v834
        %v873 = vpack.c.bf16 %v836, %v836
        %v874 = vpack.c.bf16 %v846, %v845
        %v875 = vpack.c.bf16 %v847, %v847
        %878 = vrot.lane.b32.xlu0 %v874, 96
        %v879 = vpop.permute.xlu0 %878
        %880 = vrot.lane.b32.xlu0 %v875, 96
        %v881 = vpop.permute.xlu0 %880
        %vm882 = vcmask 64512
        %v884 = vsel %vm882, %v872, 0
        %v887 = vsel %vm882, %v873, 0
        %v890 = vsel %vm882, %v879, 0
        %v893 = vsel %vm882, %v881, 0
        %895 = vmatprep.subr.bf16.mxu0 0
        %896 = vmatpush1.bf16.xpose.msra.mxu0 0
        %897 = vmatprep.subr.bf16.mxu0 0
        %898 = vmatpush1.bf16.xpose.msra.mxu0 0
        %899 = vmatprep.subr.bf16.mxu0 0
        %900 = vmatpush1.bf16.xpose.msra.mxu0 0
        %901 = vmatprep.subr.bf16.mxu0 0
        %902 = vmatpush1.bf16.xpose.msra.mxu0 0
        %903 = vmatprep.subr.bf16.mxu0 0
        %904 = vmatpush1.bf16.xpose.msra.mxu0 0
        %905 = vmatprep.subr.bf16.mxu0 0
        %906 = vmatpush1.bf16.xpose.msra.mxu0 0
        %907 = vmatprep.subr.bf16.mxu0 0
        %908 = vmatpush1.bf16.xpose.msra.mxu0 %v893
        %909 = vmatprep.subr.bf16.mxu0 0
        %910 = vmatpush1.bf16.xpose.msra.mxu0 %v890
        %911 = vmatprep.subr.bf16.mxu0 0
        %912 = vmatpush2.bf16.xpose.msra.mxu0 0
        %913 = vmatprep.subr.bf16.mxu0 0
        %914 = vmatpush2.bf16.xpose.msra.mxu0 0
        %915 = vmatprep.subr.bf16.mxu0 0
        %916 = vmatpush2.bf16.xpose.msra.mxu0 0
        %917 = vmatprep.subr.bf16.mxu0 0
        %918 = vmatpush2.bf16.xpose.msra.mxu0 0
        %919 = vmatprep.subr.bf16.mxu0 0
        %920 = vmatpush2.bf16.xpose.msra.mxu0 0
        %921 = vmatprep.subr.bf16.mxu0 0
        %922 = vmatpush2.bf16.xpose.msra.mxu0 0
        %923 = vmatprep.subr.bf16.mxu0 0
        %924 = vmatpush2.bf16.xpose.msra.mxu0 0
        %925 = vmatprep.subr.bf16.mxu0 0
        %926 = vmatpush2.bf16.xpose.msra.mxu0 0
        %927 = vmatprep.mubr.bf16.mxu0 0
        %928 = vmatmul.mubr.bf16.gmra.mxu0 %v884
        %v929 = vpop.f32.mrf.mxu0
        %v930 = vadd.f32 0.0, %v929
        %v931 = vpop.f32.mrf.mxu0
        %v932 = vpop.f32.mrf.mxu0
        %v933 = vadd.f32 0.0, %v932
        %v934 = vpop.f32.mrf.mxu0
        %935 = vmatprep.mubr.bf16.mxu0 0
        %936 = vmatmul.mubr.bf16.gmra.mxu0 %v887
        %v937 = vpop.f32.mrf.mxu0
        %v938 = vadd.f32 0.0, %v937
        %v939 = vpop.f32.mrf.mxu0
        %v940 = vpop.f32.mrf.mxu0
        %v941 = vpop.f32.mrf.mxu0
        %942 = vdwg.mxu0
        %v943 = vmul.f32 %v930, 0.35355338
        %v944 = vmul.f32 %v933, 0.35355338
        %v945 = vmul.f32 %v938, 0.35355338
        %v946 = vadd.f32 %v943, %v864
        %v947 = vadd.f32 %v944, %v864
        %v948 = vadd.f32 %v945, %v864
        %vm949 = vcmask 195584
        %v950 = vsel %vm949, %v946, -inf
        %951 = vmax.xlane.f32.xlu0 %v950
        %v952 = vpop.xlane.xlu0 %951
        %v953 = vsel %vm949, %v947, -inf
        %954 = vmax.xlane.f32.xlu0 %v953
        %v955 = vpop.xlane.xlu0 %954
        %v956 = vsel %vm949, %v948, -inf
        %957 = vmax.xlane.f32.xlu0 %v956
        %v958 = vpop.xlane.xlu0 %957
        %v959 = vsub.f32 %v946, %v952
        %v960 = vsub.f32 %v947, %v955
        %v961 = vsub.f32 %v948, %v958
        %v962 = vmul.f32 %v959, 1.442695
        %v963 = vpow.pop %v962
        %v964 = vmul.f32 %v960, 1.442695
        %v965 = vpow.pop %v964
        %v966 = vmul.f32 %v961, 1.442695
        %v967 = vpow.pop %v966
        %v968 = vsel %vm949, %v963, 0.0
        %969 = vadd.xlane.f32.xlu0 %v968
        %v970 = vpop.xlane.xlu0 %969
        %v971 = vsel %vm949, %v965, 0.0
        %972 = vadd.xlane.f32.xlu0 %v971
        %v973 = vpop.xlane.xlu0 %972
        %v974 = vsel %vm949, %v967, 0.0
        %975 = vadd.xlane.f32.xlu0 %v974
        %v976 = vpop.xlane.xlu0 %975
        %v977 = vrcp.pop %v970
        %v978 = vrcp.pop %v973
        %v979 = vrcp.pop %v976
        %v980 = vmul.f32 %v963, %v977
        %v981 = vmul.f32 %v965, %v978
        %v982 = vmul.f32 %v967, %v979
        %v983 = vpack.c.bf16 %v981, %v980
        %v984 = vpack.c.bf16 %v982, %v982
        %987 = vrot.lane.b32.xlu0 %v859, 64
        %v988 = vpop.permute.xlu0 %987
        %989 = vrot.lane.b32.xlu0 %v860, 64
        %v990 = vpop.permute.xlu0 %989
        %v993 = vsel %vm949, %v983, 0
        %v996 = vsel %vm949, %v984, 0
        %vm998 = vcmask 1043456
        %v1000 = vsel %vm998, %v990, 0
        %1002 = vmatprep.subr.bf16.mxu0 0
        %1003 = vmatpush1.bf16.msra.mxu0 0
        %1004 = vmatprep.subr.bf16.mxu0 0
        %1005 = vmatpush1.bf16.msra.mxu0 0
        %1006 = vmatprep.subr.bf16.mxu0 0
        %1007 = vmatpush1.bf16.msra.mxu0 0
        %1008 = vmatprep.subr.bf16.mxu0 0
        %1009 = vmatpush1.bf16.msra.mxu0 0
        %1010 = vmatprep.subr.bf16.mxu0 0
        %1011 = vmatpush1.bf16.msra.mxu0 0
        %1012 = vmatprep.subr.bf16.mxu0 0
        %1013 = vmatpush1.bf16.msra.mxu0 0
        %1014 = vmatprep.subr.bf16.mxu0 0
        %1015 = vmatpush1.bf16.msra.mxu0 %v1000
        %1016 = vmatprep.subr.bf16.mxu0 0
        %1017 = vmatpush1.bf16.msra.mxu0 %v988
        %1018 = vmatprep.subr.bf16.mxu0 0
        %1019 = vmatpush2.bf16.msra.mxu0 0
        %1020 = vmatprep.subr.bf16.mxu0 0
        %1021 = vmatpush2.bf16.msra.mxu0 0
        %1022 = vmatprep.subr.bf16.mxu0 0
        %1023 = vmatpush2.bf16.msra.mxu0 0
        %1024 = vmatprep.subr.bf16.mxu0 0
        %1025 = vmatpush2.bf16.msra.mxu0 0
        %1026 = vmatprep.subr.bf16.mxu0 0
        %1027 = vmatpush2.bf16.msra.mxu0 0
        %1028 = vmatprep.subr.bf16.mxu0 0
        %1029 = vmatpush2.bf16.msra.mxu0 0
        %1030 = vmatprep.subr.bf16.mxu0 0
        %1031 = vmatpush2.bf16.msra.mxu0 0
        %1032 = vmatprep.subr.bf16.mxu0 0
        %1033 = vmatpush2.bf16.msra.mxu0 0
        %1034 = vmatprep.mubr.bf16.mxu0 0
        %1035 = vmatmul.mubr.bf16.gmra.mxu0 %v993
        %v1036 = vpop.f32.mrf.mxu0
        %v1037 = vadd.f32 0.0, %v1036
        %v1038 = vpop.f32.mrf.mxu0
        %v1039 = vpop.f32.mrf.mxu0
        %v1040 = vadd.f32 0.0, %v1039
        %v1041 = vpop.f32.mrf.mxu0
        %1042 = vmatprep.mubr.bf16.mxu0 0
        %1043 = vmatmul.mubr.bf16.gmra.mxu0 %v996
        %v1044 = vpop.f32.mrf.mxu0
        %v1045 = vadd.f32 0.0, %v1044
        %v1046 = vpop.f32.mrf.mxu0
        %v1047 = vpop.f32.mrf.mxu0
        %v1048 = vpop.f32.mrf.mxu0
        %1049 = vdwg.mxu0
        %v1050 = vpack.c.bf16 %v1040, %v1037
        %v1051 = vpack.c.bf16 %v1045, %v1045
        %v1052 = vld [vmem:[%s523] sm:$0xf]
        %v1054 = vsel %vm882, %v1050, 0
        %v1057 = vsel %vm882, %v1051, 0
        %v1060 = vsel %vm998, %v1052, 0
        %1062 = vmatprep.subr.bf16.mxu0 0
        %1063 = vmatpush1.bf16.msra.mxu0 0
        %1064 = vmatprep.subr.bf16.mxu0 0
        %1065 = vmatpush1.bf16.msra.mxu0 0
        %1066 = vmatprep.subr.bf16.mxu0 0
        %1067 = vmatpush1.bf16.msra.mxu0 0
        %1068 = vmatprep.subr.bf16.mxu0 0
        %1069 = vmatpush1.bf16.msra.mxu0 0
        %1070 = vmatprep.subr.bf16.mxu0 0
        %1071 = vmatpush1.bf16.msra.mxu0 0
        %1072 = vmatprep.subr.bf16.mxu0 0
        %1073 = vmatpush1.bf16.msra.mxu0 0
        %1074 = vmatprep.subr.bf16.mxu0 0
        %1075 = vmatpush1.bf16.msra.mxu0 0
        %1076 = vmatprep.subr.bf16.mxu0 0
        %1077 = vmatpush1.bf16.msra.mxu0 %v1060
        %1078 = vmatprep.subr.bf16.mxu0 0
        %1079 = vmatpush2.bf16.msra.mxu0 0
        %1080 = vmatprep.subr.bf16.mxu0 0
        %1081 = vmatpush2.bf16.msra.mxu0 0
        %1082 = vmatprep.subr.bf16.mxu0 0
        %1083 = vmatpush2.bf16.msra.mxu0 0
        %1084 = vmatprep.subr.bf16.mxu0 0
        %1085 = vmatpush2.bf16.msra.mxu0 0
        %1086 = vmatprep.subr.bf16.mxu0 0
        %1087 = vmatpush2.bf16.msra.mxu0 0
        %1088 = vmatprep.subr.bf16.mxu0 0
        %1089 = vmatpush2.bf16.msra.mxu0 0
        %1090 = vmatprep.subr.bf16.mxu0 0
        %1091 = vmatpush2.bf16.msra.mxu0 0
        %1092 = vmatprep.subr.bf16.mxu0 0
        %1093 = vmatpush2.bf16.msra.mxu0 0
        %1094 = vmatprep.mubr.bf16.mxu0 0
        %1095 = vmatmul.mubr.bf16.gmra.mxu0 %v1054
        %v1096 = vpop.f32.mrf.mxu0
        %v1097 = vadd.f32 0.0, %v1096
        %v1098 = vpop.f32.mrf.mxu0
        %v1099 = vpop.f32.mrf.mxu0
        %v1100 = vadd.f32 0.0, %v1099
        %v1101 = vpop.f32.mrf.mxu0
        %1102 = vmatprep.mubr.bf16.mxu0 0
        %1103 = vmatmul.mubr.bf16.gmra.mxu0 %v1057
        %v1104 = vpop.f32.mrf.mxu0
        %v1105 = vadd.f32 0.0, %v1104
        %v1106 = vpop.f32.mrf.mxu0
        %v1107 = vpop.f32.mrf.mxu0
        %v1108 = vpop.f32.mrf.mxu0
        %1109 = vdwg.mxu0
        %v1110 = vadd.f32 %v869, %v1097
        %v1111 = vadd.f32 %v870, %v1100
        %v1112 = vadd.f32 %v871, %v1105
        %1115 = vrot.lane.b32.xlu0 %v872, 120
        %v1116 = vpop.permute.xlu0 %1115
        %1117 = vrot.lane.b32.xlu0 %v873, 120
        %v1118 = vpop.permute.xlu0 %1117
        %1119 = vrot.lane.b32.xlu0 %v874, 88
        %v1120 = vpop.permute.xlu0 %1119
        %1121 = vrot.lane.b32.xlu0 %v875, 88
        %v1122 = vpop.permute.xlu0 %1121
        %v1124 = vsel %vm882, %v1116, 0
        %v1127 = vsel %vm882, %v1118, 0
        %v1130 = vsel %vm882, %v1120, 0
        %v1133 = vsel %vm882, %v1122, 0
        %1135 = vmatprep.subr.bf16.mxu0 0
        %1136 = vmatpush1.bf16.xpose.msra.mxu0 0
        %1137 = vmatprep.subr.bf16.mxu0 0
        %1138 = vmatpush1.bf16.xpose.msra.mxu0 0
        %1139 = vmatprep.subr.bf16.mxu0 0
        %1140 = vmatpush1.bf16.xpose.msra.mxu0 0
        %1141 = vmatprep.subr.bf16.mxu0 0
        %1142 = vmatpush1.bf16.xpose.msra.mxu0 0
        %1143 = vmatprep.subr.bf16.mxu0 0
        %1144 = vmatpush1.bf16.xpose.msra.mxu0 0
        %1145 = vmatprep.subr.bf16.mxu0 0
        %1146 = vmatpush1.bf16.xpose.msra.mxu0 0
        %1147 = vmatprep.subr.bf16.mxu0 0
        %1148 = vmatpush1.bf16.xpose.msra.mxu0 %v1133
        %1149 = vmatprep.subr.bf16.mxu0 0
        %1150 = vmatpush1.bf16.xpose.msra.mxu0 %v1130
        %1151 = vmatprep.subr.bf16.mxu0 0
        %1152 = vmatpush2.bf16.xpose.msra.mxu0 0
        %1153 = vmatprep.subr.bf16.mxu0 0
        %1154 = vmatpush2.bf16.xpose.msra.mxu0 0
        %1155 = vmatprep.subr.bf16.mxu0 0
        %1156 = vmatpush2.bf16.xpose.msra.mxu0 0
        %1157 = vmatprep.subr.bf16.mxu0 0
        %1158 = vmatpush2.bf16.xpose.msra.mxu0 0
        %1159 = vmatprep.subr.bf16.mxu0 0
        %1160 = vmatpush2.bf16.xpose.msra.mxu0 0
        %1161 = vmatprep.subr.bf16.mxu0 0
        %1162 = vmatpush2.bf16.xpose.msra.mxu0 0
        %1163 = vmatprep.subr.bf16.mxu0 0
        %1164 = vmatpush2.bf16.xpose.msra.mxu0 0
        %1165 = vmatprep.subr.bf16.mxu0 0
        %1166 = vmatpush2.bf16.xpose.msra.mxu0 0
        %1167 = vmatprep.mubr.bf16.mxu0 0
        %1168 = vmatmul.mubr.bf16.gmra.mxu0 %v1124
        %v1169 = vpop.f32.mrf.mxu0
        %v1170 = vadd.f32 0.0, %v1169
        %v1171 = vpop.f32.mrf.mxu0
        %v1172 = vpop.f32.mrf.mxu0
        %v1173 = vadd.f32 0.0, %v1172
        %v1174 = vpop.f32.mrf.mxu0
        %1175 = vmatprep.mubr.bf16.mxu0 0
        %1176 = vmatmul.mubr.bf16.gmra.mxu0 %v1127
        %v1177 = vpop.f32.mrf.mxu0
        %v1178 = vadd.f32 0.0, %v1177
        %v1179 = vpop.f32.mrf.mxu0
        %v1180 = vpop.f32.mrf.mxu0
        %v1181 = vpop.f32.mrf.mxu0
        %1182 = vdwg.mxu0
        %v1183 = vmul.f32 %v1170, 0.35355338
        %v1184 = vmul.f32 %v1173, 0.35355338
        %v1185 = vmul.f32 %v1178, 0.35355338
        %v1186 = vadd.f32 %v1183, %v864
        %v1187 = vadd.f32 %v1184, %v864
        %v1188 = vadd.f32 %v1185, %v864
        %v1189 = vsel %vm949, %v1186, -inf
        %1190 = vmax.xlane.f32.xlu0 %v1189
        %v1191 = vpop.xlane.xlu0 %1190
        %v1192 = vsel %vm949, %v1187, -inf
        %1193 = vmax.xlane.f32.xlu0 %v1192
        %v1194 = vpop.xlane.xlu0 %1193
        %v1195 = vsel %vm949, %v1188, -inf
        %1196 = vmax.xlane.f32.xlu0 %v1195
        %v1197 = vpop.xlane.xlu0 %1196
        %v1198 = vsub.f32 %v1186, %v1191
        %v1199 = vsub.f32 %v1187, %v1194
        %v1200 = vsub.f32 %v1188, %v1197
        %v1201 = vmul.f32 %v1198, 1.442695
        %v1202 = vpow.pop %v1201
        %v1203 = vmul.f32 %v1199, 1.442695
        %v1204 = vpow.pop %v1203
        %v1205 = vmul.f32 %v1200, 1.442695
        %v1206 = vpow.pop %v1205
        %v1207 = vsel %vm949, %v1202, 0.0
        %1208 = vadd.xlane.f32.xlu0 %v1207
        %v1209 = vpop.xlane.xlu0 %1208
        %v1210 = vsel %vm949, %v1204, 0.0
        %1211 = vadd.xlane.f32.xlu0 %v1210
        %v1212 = vpop.xlane.xlu0 %1211
        %v1213 = vsel %vm949, %v1206, 0.0
        %1214 = vadd.xlane.f32.xlu0 %v1213
        %v1215 = vpop.xlane.xlu0 %1214
        %v1216 = vrcp.pop %v1209
        %v1217 = vrcp.pop %v1212
        %v1218 = vrcp.pop %v1215
        %v1219 = vmul.f32 %v1202, %v1216
        %v1220 = vmul.f32 %v1204, %v1217
        %v1221 = vmul.f32 %v1206, %v1218
        %v1222 = vpack.c.bf16 %v1220, %v1219
        %v1223 = vpack.c.bf16 %v1221, %v1221
        %1224 = vrot.lane.b32.xlu0 %v859, 56
        %v1225 = vpop.permute.xlu0 %1224
        %1226 = vrot.lane.b32.xlu0 %v860, 56
        %v1227 = vpop.permute.xlu0 %1226
        %v1230 = vsel %vm949, %v1222, 0
        %v1233 = vsel %vm949, %v1223, 0
        %v1236 = vsel %vm998, %v1227, 0
        %1238 = vmatprep.subr.bf16.mxu0 0
        %1239 = vmatpush1.bf16.msra.mxu0 0
        %1240 = vmatprep.subr.bf16.mxu0 0
        %1241 = vmatpush1.bf16.msra.mxu0 0
        %1242 = vmatprep.subr.bf16.mxu0 0
        %1243 = vmatpush1.bf16.msra.mxu0 0
        %1244 = vmatprep.subr.bf16.mxu0 0
        %1245 = vmatpush1.bf16.msra.mxu0 0
        %1246 = vmatprep.subr.bf16.mxu0 0
        %1247 = vmatpush1.bf16.msra.mxu0 0
        %1248 = vmatprep.subr.bf16.mxu0 0
        %1249 = vmatpush1.bf16.msra.mxu0 0
        %1250 = vmatprep.subr.bf16.mxu0 0
        %1251 = vmatpush1.bf16.msra.mxu0 %v1236
        %1252 = vmatprep.subr.bf16.mxu0 0
        %1253 = vmatpush1.bf16.msra.mxu0 %v1225
        %1254 = vmatprep.subr.bf16.mxu0 0
        %1255 = vmatpush2.bf16.msra.mxu0 0
        %1256 = vmatprep.subr.bf16.mxu0 0
        %1257 = vmatpush2.bf16.msra.mxu0 0
        %1258 = vmatprep.subr.bf16.mxu0 0
        %1259 = vmatpush2.bf16.msra.mxu0 0
        %1260 = vmatprep.subr.bf16.mxu0 0
        %1261 = vmatpush2.bf16.msra.mxu0 0
        %1262 = vmatprep.subr.bf16.mxu0 0
        %1263 = vmatpush2.bf16.msra.mxu0 0
        %1264 = vmatprep.subr.bf16.mxu0 0
        %1265 = vmatpush2.bf16.msra.mxu0 0
        %1266 = vmatprep.subr.bf16.mxu0 0
        %1267 = vmatpush2.bf16.msra.mxu0 0
        %1268 = vmatprep.subr.bf16.mxu0 0
        %1269 = vmatpush2.bf16.msra.mxu0 0
        %1270 = vmatprep.mubr.bf16.mxu0 0
        %1271 = vmatmul.mubr.bf16.gmra.mxu0 %v1230
        %v1272 = vpop.f32.mrf.mxu0
        %v1273 = vadd.f32 0.0, %v1272
        %v1274 = vpop.f32.mrf.mxu0
        %v1275 = vpop.f32.mrf.mxu0
        %v1276 = vadd.f32 0.0, %v1275
        %v1277 = vpop.f32.mrf.mxu0
        %1278 = vmatprep.mubr.bf16.mxu0 0
        %1279 = vmatmul.mubr.bf16.gmra.mxu0 %v1233
        %v1280 = vpop.f32.mrf.mxu0
        %v1281 = vadd.f32 0.0, %v1280
        %v1282 = vpop.f32.mrf.mxu0
        %v1283 = vpop.f32.mrf.mxu0
        %v1284 = vpop.f32.mrf.mxu0
        %1285 = vdwg.mxu0
        %v1286 = vpack.c.bf16 %v1276, %v1273
        %v1287 = vpack.c.bf16 %v1281, %v1281
        %s1288 = scalar_lea.vmem %s523, 4
        %v1289 = vld [vmem:[%s1288] sm:$0xf]
        %v1291 = vsel %vm882, %v1286, 0
        %v1294 = vsel %vm882, %v1287, 0
        %v1297 = vsel %vm998, %v1289, 0
        %1299 = vmatprep.subr.bf16.mxu0 0
        %1300 = vmatpush1.bf16.msra.mxu0 0
        %1301 = vmatprep.subr.bf16.mxu0 0
        %1302 = vmatpush1.bf16.msra.mxu0 0
        %1303 = vmatprep.subr.bf16.mxu0 0
        %1304 = vmatpush1.bf16.msra.mxu0 0
        %1305 = vmatprep.subr.bf16.mxu0 0
        %1306 = vmatpush1.bf16.msra.mxu0 0
        %1307 = vmatprep.subr.bf16.mxu0 0
        %1308 = vmatpush1.bf16.msra.mxu0 0
        %1309 = vmatprep.subr.bf16.mxu0 0
        %1310 = vmatpush1.bf16.msra.mxu0 0
        %1311 = vmatprep.subr.bf16.mxu0 0
        %1312 = vmatpush1.bf16.msra.mxu0 0
        %1313 = vmatprep.subr.bf16.mxu0 0
        %1314 = vmatpush1.bf16.msra.mxu0 %v1297
        %1315 = vmatprep.subr.bf16.mxu0 0
        %1316 = vmatpush2.bf16.msra.mxu0 0
        %1317 = vmatprep.subr.bf16.mxu0 0
        %1318 = vmatpush2.bf16.msra.mxu0 0
        %1319 = vmatprep.subr.bf16.mxu0 0
        %1320 = vmatpush2.bf16.msra.mxu0 0
        %1321 = vmatprep.subr.bf16.mxu0 0
        %1322 = vmatpush2.bf16.msra.mxu0 0
        %1323 = vmatprep.subr.bf16.mxu0 0
        %1324 = vmatpush2.bf16.msra.mxu0 0
        %1325 = vmatprep.subr.bf16.mxu0 0
        %1326 = vmatpush2.bf16.msra.mxu0 0
        %1327 = vmatprep.subr.bf16.mxu0 0
        %1328 = vmatpush2.bf16.msra.mxu0 0
        %1329 = vmatprep.subr.bf16.mxu0 0
        %1330 = vmatpush2.bf16.msra.mxu0 0
        %1331 = vmatprep.mubr.bf16.mxu0 0
        %1332 = vmatmul.mubr.bf16.gmra.mxu0 %v1291
        %v1333 = vpop.f32.mrf.mxu0
        %v1334 = vadd.f32 0.0, %v1333
        %v1335 = vpop.f32.mrf.mxu0
        %v1336 = vpop.f32.mrf.mxu0
        %v1337 = vadd.f32 0.0, %v1336
        %v1338 = vpop.f32.mrf.mxu0
        %1339 = vmatprep.mubr.bf16.mxu0 0
        %1340 = vmatmul.mubr.bf16.gmra.mxu0 %v1294
        %v1341 = vpop.f32.mrf.mxu0
        %v1342 = vadd.f32 0.0, %v1341
        %v1343 = vpop.f32.mrf.mxu0
        %v1344 = vpop.f32.mrf.mxu0
        %v1345 = vpop.f32.mrf.mxu0
        %1346 = vdwg.mxu0
        %v1347 = vadd.f32 %v1110, %v1334
        %v1348 = vadd.f32 %v1111, %v1337
        %v1349 = vadd.f32 %v1112, %v1342
        %1350 = vrot.lane.b32.xlu0 %v872, 112
        %v1351 = vpop.permute.xlu0 %1350
        %1352 = vrot.lane.b32.xlu0 %v873, 112
        %v1353 = vpop.permute.xlu0 %1352
        %1354 = vrot.lane.b32.xlu0 %v874, 80
        %v1355 = vpop.permute.xlu0 %1354
        %1356 = vrot.lane.b32.xlu0 %v875, 80
        %v1357 = vpop.permute.xlu0 %1356
        %v1359 = vsel %vm882, %v1351, 0
        %v1362 = vsel %vm882, %v1353, 0
        %v1365 = vsel %vm882, %v1355, 0
        %v1368 = vsel %vm882, %v1357, 0
        %1370 = vmatprep.subr.bf16.mxu0 0
        %1371 = vmatpush1.bf16.xpose.msra.mxu0 0
        %1372 = vmatprep.subr.bf16.mxu0 0
        %1373 = vmatpush1.bf16.xpose.msra.mxu0 0
        %1374 = vmatprep.subr.bf16.mxu0 0
        %1375 = vmatpush1.bf16.xpose.msra.mxu0 0
        %1376 = vmatprep.subr.bf16.mxu0 0
        %1377 = vmatpush1.bf16.xpose.msra.mxu0 0
        %1378 = vmatprep.subr.bf16.mxu0 0
        %1379 = vmatpush1.bf16.xpose.msra.mxu0 0
        %1380 = vmatprep.subr.bf16.mxu0 0
        %1381 = vmatpush1.bf16.xpose.msra.mxu0 0
        %1382 = vmatprep.subr.bf16.mxu0 0
        %1383 = vmatpush1.bf16.xpose.msra.mxu0 %v1368
        %1384 = vmatprep.subr.bf16.mxu0 0
        %1385 = vmatpush1.bf16.xpose.msra.mxu0 %v1365
        %1386 = vmatprep.subr.bf16.mxu0 0
        %1387 = vmatpush2.bf16.xpose.msra.mxu0 0
        %1388 = vmatprep.subr.bf16.mxu0 0
        %1389 = vmatpush2.bf16.xpose.msra.mxu0 0
        %1390 = vmatprep.subr.bf16.mxu0 0
        %1391 = vmatpush2.bf16.xpose.msra.mxu0 0
        %1392 = vmatprep.subr.bf16.mxu0 0
        %1393 = vmatpush2.bf16.xpose.msra.mxu0 0
        %1394 = vmatprep.subr.bf16.mxu0 0
        %1395 = vmatpush2.bf16.xpose.msra.mxu0 0
        %1396 = vmatprep.subr.bf16.mxu0 0
        %1397 = vmatpush2.bf16.xpose.msra.mxu0 0
        %1398 = vmatprep.subr.bf16.mxu0 0
        %1399 = vmatpush2.bf16.xpose.msra.mxu0 0
        %1400 = vmatprep.subr.bf16.mxu0 0
        %1401 = vmatpush2.bf16.xpose.msra.mxu0 0
        %1402 = vmatprep.mubr.bf16.mxu0 0
        %1403 = vmatmul.mubr.bf16.gmra.mxu0 %v1359
        %v1404 = vpop.f32.mrf.mxu0
        %v1405 = vadd.f32 0.0, %v1404
        %v1406 = vpop.f32.mrf.mxu0
        %v1407 = vpop.f32.mrf.mxu0
        %v1408 = vadd.f32 0.0, %v1407
        %v1409 = vpop.f32.mrf.mxu0
        %1410 = vmatprep.mubr.bf16.mxu0 0
        %1411 = vmatmul.mubr.bf16.gmra.mxu0 %v1362
        %v1412 = vpop.f32.mrf.mxu0
        %v1413 = vadd.f32 0.0, %v1412
        %v1414 = vpop.f32.mrf.mxu0
        %v1415 = vpop.f32.mrf.mxu0
        %v1416 = vpop.f32.mrf.mxu0
        %1417 = vdwg.mxu0
        %v1418 = vmul.f32 %v1405, 0.35355338
        %v1419 = vmul.f32 %v1408, 0.35355338
        %v1420 = vmul.f32 %v1413, 0.35355338
        %v1421 = vadd.f32 %v1418, %v864
        %v1422 = vadd.f32 %v1419, %v864
        %v1423 = vadd.f32 %v1420, %v864
        %v1424 = vsel %vm949, %v1421, -inf
        %1425 = vmax.xlane.f32.xlu0 %v1424
        %v1426 = vpop.xlane.xlu0 %1425
        %v1427 = vsel %vm949, %v1422, -inf
        %1428 = vmax.xlane.f32.xlu0 %v1427
        %v1429 = vpop.xlane.xlu0 %1428
        %v1430 = vsel %vm949, %v1423, -inf
        %1431 = vmax.xlane.f32.xlu0 %v1430
        %v1432 = vpop.xlane.xlu0 %1431
        %v1433 = vsub.f32 %v1421, %v1426
        %v1434 = vsub.f32 %v1422, %v1429
        %v1435 = vsub.f32 %v1423, %v1432
        %v1436 = vmul.f32 %v1433, 1.442695
        %v1437 = vpow.pop %v1436
        %v1438 = vmul.f32 %v1434, 1.442695
        %v1439 = vpow.pop %v1438
        %v1440 = vmul.f32 %v1435, 1.442695
        %v1441 = vpow.pop %v1440
        %v1442 = vsel %vm949, %v1437, 0.0
        %1443 = vadd.xlane.f32.xlu0 %v1442
        %v1444 = vpop.xlane.xlu0 %1443
        %v1445 = vsel %vm949, %v1439, 0.0
        %1446 = vadd.xlane.f32.xlu0 %v1445
        %v1447 = vpop.xlane.xlu0 %1446
        %v1448 = vsel %vm949, %v1441, 0.0
        %1449 = vadd.xlane.f32.xlu0 %v1448
        %v1450 = vpop.xlane.xlu0 %1449
        %v1451 = vrcp.pop %v1444
        %v1452 = vrcp.pop %v1447
        %v1453 = vrcp.pop %v1450
        %v1454 = vmul.f32 %v1437, %v1451
        %v1455 = vmul.f32 %v1439, %v1452
        %v1456 = vmul.f32 %v1441, %v1453
        %v1457 = vpack.c.bf16 %v1455, %v1454
        %v1458 = vpack.c.bf16 %v1456, %v1456
        %1459 = vrot.lane.b32.xlu0 %v859, 48
        %v1460 = vpop.permute.xlu0 %1459
        %1461 = vrot.lane.b32.xlu0 %v860, 48
        %v1462 = vpop.permute.xlu0 %1461
        %v1465 = vsel %vm949, %v1457, 0
        %v1468 = vsel %vm949, %v1458, 0
        %v1471 = vsel %vm998, %v1462, 0
        %1473 = vmatprep.subr.bf16.mxu0 0
        %1474 = vmatpush1.bf16.msra.mxu0 0
        %1475 = vmatprep.subr.bf16.mxu0 0
        %1476 = vmatpush1.bf16.msra.mxu0 0
        %1477 = vmatprep.subr.bf16.mxu0 0
        %1478 = vmatpush1.bf16.msra.mxu0 0
        %1479 = vmatprep.subr.bf16.mxu0 0
        %1480 = vmatpush1.bf16.msra.mxu0 0
        %1481 = vmatprep.subr.bf16.mxu0 0
        %1482 = vmatpush1.bf16.msra.mxu0 0
        %1483 = vmatprep.subr.bf16.mxu0 0
        %1484 = vmatpush1.bf16.msra.mxu0 0
        %1485 = vmatprep.subr.bf16.mxu0 0
        %1486 = vmatpush1.bf16.msra.mxu0 %v1471
        %1487 = vmatprep.subr.bf16.mxu0 0
        %1488 = vmatpush1.bf16.msra.mxu0 %v1460
        %1489 = vmatprep.subr.bf16.mxu0 0
        %1490 = vmatpush2.bf16.msra.mxu0 0
        %1491 = vmatprep.subr.bf16.mxu0 0
        %1492 = vmatpush2.bf16.msra.mxu0 0
        %1493 = vmatprep.subr.bf16.mxu0 0
        %1494 = vmatpush2.bf16.msra.mxu0 0
        %1495 = vmatprep.subr.bf16.mxu0 0
        %1496 = vmatpush2.bf16.msra.mxu0 0
        %1497 = vmatprep.subr.bf16.mxu0 0
        %1498 = vmatpush2.bf16.msra.mxu0 0
        %1499 = vmatprep.subr.bf16.mxu0 0
        %1500 = vmatpush2.bf16.msra.mxu0 0
        %1501 = vmatprep.subr.bf16.mxu0 0
        %1502 = vmatpush2.bf16.msra.mxu0 0
        %1503 = vmatprep.subr.bf16.mxu0 0
        %1504 = vmatpush2.bf16.msra.mxu0 0
        %1505 = vmatprep.mubr.bf16.mxu0 0
        %1506 = vmatmul.mubr.bf16.gmra.mxu0 %v1465
        %v1507 = vpop.f32.mrf.mxu0
        %v1508 = vadd.f32 0.0, %v1507
        %v1509 = vpop.f32.mrf.mxu0
        %v1510 = vpop.f32.mrf.mxu0
        %v1511 = vadd.f32 0.0, %v1510
        %v1512 = vpop.f32.mrf.mxu0
        %1513 = vmatprep.mubr.bf16.mxu0 0
        %1514 = vmatmul.mubr.bf16.gmra.mxu0 %v1468
        %v1515 = vpop.f32.mrf.mxu0
        %v1516 = vadd.f32 0.0, %v1515
        %v1517 = vpop.f32.mrf.mxu0
        %v1518 = vpop.f32.mrf.mxu0
        %v1519 = vpop.f32.mrf.mxu0
        %1520 = vdwg.mxu0
        %v1521 = vpack.c.bf16 %v1511, %v1508
        %v1522 = vpack.c.bf16 %v1516, %v1516
        %s1523 = scalar_lea.vmem %s523, 8
        %v1524 = vld [vmem:[%s1523] sm:$0xf]
        %v1526 = vsel %vm882, %v1521, 0
        %v1529 = vsel %vm882, %v1522, 0
        %v1532 = vsel %vm998, %v1524, 0
        %1534 = vmatprep.subr.bf16.mxu0 0
        %1535 = vmatpush1.bf16.msra.mxu0 0
        %1536 = vmatprep.subr.bf16.mxu0 0
        %1537 = vmatpush1.bf16.msra.mxu0 0
        %1538 = vmatprep.subr.bf16.mxu0 0
        %1539 = vmatpush1.bf16.msra.mxu0 0
        %1540 = vmatprep.subr.bf16.mxu0 0
        %1541 = vmatpush1.bf16.msra.mxu0 0
        %1542 = vmatprep.subr.bf16.mxu0 0
        %1543 = vmatpush1.bf16.msra.mxu0 0
        %1544 = vmatprep.subr.bf16.mxu0 0
        %1545 = vmatpush1.bf16.msra.mxu0 0
        %1546 = vmatprep.subr.bf16.mxu0 0
        %1547 = vmatpush1.bf16.msra.mxu0 0
        %1548 = vmatprep.subr.bf16.mxu0 0
        %1549 = vmatpush1.bf16.msra.mxu0 %v1532
        %1550 = vmatprep.subr.bf16.mxu0 0
        %1551 = vmatpush2.bf16.msra.mxu0 0
        %1552 = vmatprep.subr.bf16.mxu0 0
        %1553 = vmatpush2.bf16.msra.mxu0 0
        %1554 = vmatprep.subr.bf16.mxu0 0
        %1555 = vmatpush2.bf16.msra.mxu0 0
        %1556 = vmatprep.subr.bf16.mxu0 0
        %1557 = vmatpush2.bf16.msra.mxu0 0
        %1558 = vmatprep.subr.bf16.mxu0 0
        %1559 = vmatpush2.bf16.msra.mxu0 0
        %1560 = vmatprep.subr.bf16.mxu0 0
        %1561 = vmatpush2.bf16.msra.mxu0 0
        %1562 = vmatprep.subr.bf16.mxu0 0
        %1563 = vmatpush2.bf16.msra.mxu0 0
        %1564 = vmatprep.subr.bf16.mxu0 0
        %1565 = vmatpush2.bf16.msra.mxu0 0
        %1566 = vmatprep.mubr.bf16.mxu0 0
        %1567 = vmatmul.mubr.bf16.gmra.mxu0 %v1526
        %v1568 = vpop.f32.mrf.mxu0
        %v1569 = vadd.f32 0.0, %v1568
        %v1570 = vpop.f32.mrf.mxu0
        %v1571 = vpop.f32.mrf.mxu0
        %v1572 = vadd.f32 0.0, %v1571
        %v1573 = vpop.f32.mrf.mxu0
        %1574 = vmatprep.mubr.bf16.mxu0 0
        %1575 = vmatmul.mubr.bf16.gmra.mxu0 %v1529
        %v1576 = vpop.f32.mrf.mxu0
        %v1577 = vadd.f32 0.0, %v1576
        %v1578 = vpop.f32.mrf.mxu0
        %v1579 = vpop.f32.mrf.mxu0
        %v1580 = vpop.f32.mrf.mxu0
        %1581 = vdwg.mxu0
        %v1582 = vadd.f32 %v1347, %v1569
        %v1583 = vadd.f32 %v1348, %v1572
        %v1584 = vadd.f32 %v1349, %v1577
        %1585 = vrot.lane.b32.xlu0 %v872, 104
        %v1586 = vpop.permute.xlu0 %1585
        %1587 = vrot.lane.b32.xlu0 %v873, 104
        %v1588 = vpop.permute.xlu0 %1587
        %1589 = vrot.lane.b32.xlu0 %v874, 72
        %v1590 = vpop.permute.xlu0 %1589
        %1591 = vrot.lane.b32.xlu0 %v875, 72
        %v1592 = vpop.permute.xlu0 %1591
        %v1594 = vsel %vm882, %v1586, 0
        %v1597 = vsel %vm882, %v1588, 0
        %v1600 = vsel %vm882, %v1590, 0
        %v1603 = vsel %vm882, %v1592, 0
        %1605 = vmatprep.subr.bf16.mxu0 0
        %1606 = vmatpush1.bf16.xpose.msra.mxu0 0
        %1607 = vmatprep.subr.bf16.mxu0 0
        %1608 = vmatpush1.bf16.xpose.msra.mxu0 0
        %1609 = vmatprep.subr.bf16.mxu0 0
        %1610 = vmatpush1.bf16.xpose.msra.mxu0 0
        %1611 = vmatprep.subr.bf16.mxu0 0
        %1612 = vmatpush1.bf16.xpose.msra.mxu0 0
        %1613 = vmatprep.subr.bf16.mxu0 0
        %1614 = vmatpush1.bf16.xpose.msra.mxu0 0
        %1615 = vmatprep.subr.bf16.mxu0 0
        %1616 = vmatpush1.bf16.xpose.msra.mxu0 0
        %1617 = vmatprep.subr.bf16.mxu0 0
        %1618 = vmatpush1.bf16.xpose.msra.mxu0 %v1603
        %1619 = vmatprep.subr.bf16.mxu0 0
        %1620 = vmatpush1.bf16.xpose.msra.mxu0 %v1600
        %1621 = vmatprep.subr.bf16.mxu0 0
        %1622 = vmatpush2.bf16.xpose.msra.mxu0 0
        %1623 = vmatprep.subr.bf16.mxu0 0
        %1624 = vmatpush2.bf16.xpose.msra.mxu0 0
        %1625 = vmatprep.subr.bf16.mxu0 0
        %1626 = vmatpush2.bf16.xpose.msra.mxu0 0
        %1627 = vmatprep.subr.bf16.mxu0 0
        %1628 = vmatpush2.bf16.xpose.msra.mxu0 0
        %1629 = vmatprep.subr.bf16.mxu0 0
        %1630 = vmatpush2.bf16.xpose.msra.mxu0 0
        %1631 = vmatprep.subr.bf16.mxu0 0
        %1632 = vmatpush2.bf16.xpose.msra.mxu0 0
        %1633 = vmatprep.subr.bf16.mxu0 0
        %1634 = vmatpush2.bf16.xpose.msra.mxu0 0
        %1635 = vmatprep.subr.bf16.mxu0 0
        %1636 = vmatpush2.bf16.xpose.msra.mxu0 0
        %1637 = vmatprep.mubr.bf16.mxu0 0
        %1638 = vmatmul.mubr.bf16.gmra.mxu0 %v1594
        %v1639 = vpop.f32.mrf.mxu0
        %v1640 = vadd.f32 0.0, %v1639
        %v1641 = vpop.f32.mrf.mxu0
        %v1642 = vpop.f32.mrf.mxu0
        %v1643 = vadd.f32 0.0, %v1642
        %v1644 = vpop.f32.mrf.mxu0
        %1645 = vmatprep.mubr.bf16.mxu0 0
        %1646 = vmatmul.mubr.bf16.gmra.mxu0 %v1597
        %v1647 = vpop.f32.mrf.mxu0
        %v1648 = vadd.f32 0.0, %v1647
        %v1649 = vpop.f32.mrf.mxu0
        %v1650 = vpop.f32.mrf.mxu0
        %v1651 = vpop.f32.mrf.mxu0
        %1652 = vdwg.mxu0
        %v1653 = vmul.f32 %v1640, 0.35355338
        %v1654 = vmul.f32 %v1643, 0.35355338
        %v1655 = vmul.f32 %v1648, 0.35355338
        %v1656 = vadd.f32 %v1653, %v864
        %v1657 = vadd.f32 %v1654, %v864
        %v1658 = vadd.f32 %v1655, %v864
        %v1659 = vsel %vm949, %v1656, -inf
        %1660 = vmax.xlane.f32.xlu0 %v1659
        %v1661 = vpop.xlane.xlu0 %1660
        %v1662 = vsel %vm949, %v1657, -inf
        %1663 = vmax.xlane.f32.xlu0 %v1662
        %v1664 = vpop.xlane.xlu0 %1663
        %v1665 = vsel %vm949, %v1658, -inf
        %1666 = vmax.xlane.f32.xlu0 %v1665
        %v1667 = vpop.xlane.xlu0 %1666
        %v1668 = vsub.f32 %v1656, %v1661
        %v1669 = vsub.f32 %v1657, %v1664
        %v1670 = vsub.f32 %v1658, %v1667
        %v1671 = vmul.f32 %v1668, 1.442695
        %v1672 = vpow.pop %v1671
        %v1673 = vmul.f32 %v1669, 1.442695
        %v1674 = vpow.pop %v1673
        %v1675 = vmul.f32 %v1670, 1.442695
        %v1676 = vpow.pop %v1675
        %v1677 = vsel %vm949, %v1672, 0.0
        %1678 = vadd.xlane.f32.xlu0 %v1677
        %v1679 = vpop.xlane.xlu0 %1678
        %v1680 = vsel %vm949, %v1674, 0.0
        %1681 = vadd.xlane.f32.xlu0 %v1680
        %v1682 = vpop.xlane.xlu0 %1681
        %v1683 = vsel %vm949, %v1676, 0.0
        %1684 = vadd.xlane.f32.xlu0 %v1683
        %v1685 = vpop.xlane.xlu0 %1684
        %v1686 = vrcp.pop %v1679
        %v1687 = vrcp.pop %v1682
        %v1688 = vrcp.pop %v1685
        %v1689 = vmul.f32 %v1672, %v1686
        %v1690 = vmul.f32 %v1674, %v1687
        %v1691 = vmul.f32 %v1676, %v1688
        %v1692 = vpack.c.bf16 %v1690, %v1689
        %v1693 = vpack.c.bf16 %v1691, %v1691
        %1694 = vrot.lane.b32.xlu0 %v859, 40
        %v1695 = vpop.permute.xlu0 %1694
        %1696 = vrot.lane.b32.xlu0 %v860, 40
        %v1697 = vpop.permute.xlu0 %1696
        %v1700 = vsel %vm949, %v1692, 0
        %v1703 = vsel %vm949, %v1693, 0
        %v1706 = vsel %vm998, %v1697, 0
        %1708 = vmatprep.subr.bf16.mxu0 0
        %1709 = vmatpush1.bf16.msra.mxu0 0
        %1710 = vmatprep.subr.bf16.mxu0 0
        %1711 = vmatpush1.bf16.msra.mxu0 0
        %1712 = vmatprep.subr.bf16.mxu0 0
        %1713 = vmatpush1.bf16.msra.mxu0 0
        %1714 = vmatprep.subr.bf16.mxu0 0
        %1715 = vmatpush1.bf16.msra.mxu0 0
        %1716 = vmatprep.subr.bf16.mxu0 0
        %1717 = vmatpush1.bf16.msra.mxu0 0
        %1718 = vmatprep.subr.bf16.mxu0 0
        %1719 = vmatpush1.bf16.msra.mxu0 0
        %1720 = vmatprep.subr.bf16.mxu0 0
        %1721 = vmatpush1.bf16.msra.mxu0 %v1706
        %1722 = vmatprep.subr.bf16.mxu0 0
        %1723 = vmatpush1.bf16.msra.mxu0 %v1695
        %1724 = vmatprep.subr.bf16.mxu0 0
        %1725 = vmatpush2.bf16.msra.mxu0 0
        %1726 = vmatprep.subr.bf16.mxu0 0
        %1727 = vmatpush2.bf16.msra.mxu0 0
        %1728 = vmatprep.subr.bf16.mxu0 0
        %1729 = vmatpush2.bf16.msra.mxu0 0
        %1730 = vmatprep.subr.bf16.mxu0 0
        %1731 = vmatpush2.bf16.msra.mxu0 0
        %1732 = vmatprep.subr.bf16.mxu0 0
        %1733 = vmatpush2.bf16.msra.mxu0 0
        %1734 = vmatprep.subr.bf16.mxu0 0
        %1735 = vmatpush2.bf16.msra.mxu0 0
        %1736 = vmatprep.subr.bf16.mxu0 0
        %1737 = vmatpush2.bf16.msra.mxu0 0
        %1738 = vmatprep.subr.bf16.mxu0 0
        %1739 = vmatpush2.bf16.msra.mxu0 0
        %1740 = vmatprep.mubr.bf16.mxu0 0
        %1741 = vmatmul.mubr.bf16.gmra.mxu0 %v1700
        %v1742 = vpop.f32.mrf.mxu0
        %v1743 = vadd.f32 0.0, %v1742
        %v1744 = vpop.f32.mrf.mxu0
        %v1745 = vpop.f32.mrf.mxu0
        %v1746 = vadd.f32 0.0, %v1745
        %v1747 = vpop.f32.mrf.mxu0
        %1748 = vmatprep.mubr.bf16.mxu0 0
        %1749 = vmatmul.mubr.bf16.gmra.mxu0 %v1703
        %v1750 = vpop.f32.mrf.mxu0
        %v1751 = vadd.f32 0.0, %v1750
        %v1752 = vpop.f32.mrf.mxu0
        %v1753 = vpop.f32.mrf.mxu0
        %v1754 = vpop.f32.mrf.mxu0
        %1755 = vdwg.mxu0
        %v1756 = vpack.c.bf16 %v1746, %v1743
        %v1757 = vpack.c.bf16 %v1751, %v1751
        %s1758 = scalar_lea.vmem %s523, 12
        %v1759 = vld [vmem:[%s1758] sm:$0xf]
        %v1761 = vsel %vm882, %v1756, 0
        %v1764 = vsel %vm882, %v1757, 0
        %v1767 = vsel %vm998, %v1759, 0
        %1769 = vmatprep.subr.bf16.mxu0 0
        %1770 = vmatpush1.bf16.msra.mxu0 0
        %1771 = vmatprep.subr.bf16.mxu0 0
        %1772 = vmatpush1.bf16.msra.mxu0 0
        %1773 = vmatprep.subr.bf16.mxu0 0
        %1774 = vmatpush1.bf16.msra.mxu0 0
        %1775 = vmatprep.subr.bf16.mxu0 0
        %1776 = vmatpush1.bf16.msra.mxu0 0
        %1777 = vmatprep.subr.bf16.mxu0 0
        %1778 = vmatpush1.bf16.msra.mxu0 0
        %1779 = vmatprep.subr.bf16.mxu0 0
        %1780 = vmatpush1.bf16.msra.mxu0 0
        %1781 = vmatprep.subr.bf16.mxu0 0
        %1782 = vmatpush1.bf16.msra.mxu0 0
        %1783 = vmatprep.subr.bf16.mxu0 0
        %1784 = vmatpush1.bf16.msra.mxu0 %v1767
        %1785 = vmatprep.subr.bf16.mxu0 0
        %1786 = vmatpush2.bf16.msra.mxu0 0
        %1787 = vmatprep.subr.bf16.mxu0 0
        %1788 = vmatpush2.bf16.msra.mxu0 0
        %1789 = vmatprep.subr.bf16.mxu0 0
        %1790 = vmatpush2.bf16.msra.mxu0 0
        %1791 = vmatprep.subr.bf16.mxu0 0
        %1792 = vmatpush2.bf16.msra.mxu0 0
        %1793 = vmatprep.subr.bf16.mxu0 0
        %1794 = vmatpush2.bf16.msra.mxu0 0
        %1795 = vmatprep.subr.bf16.mxu0 0
        %1796 = vmatpush2.bf16.msra.mxu0 0
        %1797 = vmatprep.subr.bf16.mxu0 0
        %1798 = vmatpush2.bf16.msra.mxu0 0
        %1799 = vmatprep.subr.bf16.mxu0 0
        %1800 = vmatpush2.bf16.msra.mxu0 0
        %1801 = vmatprep.mubr.bf16.mxu0 0
        %1802 = vmatmul.mubr.bf16.gmra.mxu0 %v1761
        %v1803 = vpop.f32.mrf.mxu0
        %v1804 = vadd.f32 0.0, %v1803
        %v1805 = vpop.f32.mrf.mxu0
        %v1806 = vpop.f32.mrf.mxu0
        %v1807 = vadd.f32 0.0, %v1806
        %v1808 = vpop.f32.mrf.mxu0
        %1809 = vmatprep.mubr.bf16.mxu0 0
        %1810 = vmatmul.mubr.bf16.gmra.mxu0 %v1764
        %v1811 = vpop.f32.mrf.mxu0
        %v1812 = vadd.f32 0.0, %v1811
        %v1813 = vpop.f32.mrf.mxu0
        %v1814 = vpop.f32.mrf.mxu0
        %v1815 = vpop.f32.mrf.mxu0
        %1816 = vdwg.mxu0
        %v1817 = vadd.f32 %v1582, %v1804
        %v1818 = vadd.f32 %v1583, %v1807
        %v1819 = vadd.f32 %v1584, %v1812
        %v1820 = vsel %vm703, %v1817, 0.0
        %1821 = vadd.xlane.f32.xlu0 %v1820
        %v1822 = vpop.xlane.xlu0 %1821
        %v1823 = vsel %vm703, %v1818, 0.0
        %1824 = vadd.xlane.f32.xlu0 %v1823
        %v1825 = vpop.xlane.xlu0 %1824
        %v1826 = vsel %vm703, %v1819, 0.0
        %1827 = vadd.xlane.f32.xlu0 %v1826
        %v1828 = vpop.xlane.xlu0 %1827
        %v1829 = vmul.f32 %v1822, %v713
        %v1830 = vmul.f32 %v1825, %v713
        %v1831 = vmul.f32 %v1828, %v713
        %v1832 = vsub.f32 %v1817, %v1829
        %v1833 = vsub.f32 %v1818, %v1830
        %v1834 = vsub.f32 %v1819, %v1831
        %v1835 = vmul.f32 %v1832, %v1832
        %v1836 = vmul.f32 %v1833, %v1833
        %v1837 = vmul.f32 %v1834, %v1834
        %v1838 = vsel %vm703, %v1835, 0.0
        %1839 = vadd.xlane.f32.xlu0 %v1838
        %v1840 = vpop.xlane.xlu0 %1839
        %v1841 = vsel %vm703, %v1836, 0.0
        %1842 = vadd.xlane.f32.xlu0 %v1841
        %v1843 = vpop.xlane.xlu0 %1842
        %v1844 = vsel %vm703, %v1837, 0.0
        %1845 = vadd.xlane.f32.xlu0 %v1844
        %v1846 = vpop.xlane.xlu0 %1845
        %v1847 = vmul.f32 %v1840, %v713
        %v1848 = vmul.f32 %v1843, %v713
        %v1849 = vmul.f32 %v1846, %v713
        %v1850 = vadd.f32 %v1847, 1e-05
        %v1851 = vadd.f32 %v1848, 1e-05
        %v1852 = vadd.f32 %v1849, 1e-05
        %v1853 = vrsqrt.pop %v1850
        %v1854 = vrsqrt.pop %v1851
        %v1855 = vrsqrt.pop %v1852
        %v1856 = vmul.f32 %v1832, %v1853
        %v1857 = vmul.f32 %v1833, %v1854
        %v1858 = vmul.f32 %v1834, %v1855
        %v1859 = vlaneseq
        %v1860 = vshrl.u32 %v1859, 7
        %v1861 = vsub.s32 2, %v1860
        %v1862 = vrot.slane %v701, %v1861
        %v1863 = vmul.f32 %v1856, %v1862
        %v1864 = vmul.f32 %v1857, %v1862
        %v1865 = vmul.f32 %v1858, %v1862
        %v1866 = vlaneseq
        %v1867 = vshrl.u32 %v1866, 7
        %v1868 = vsub.s32 3, %v1867
        %v1869 = vrot.slane %v701, %v1868
        %v1870 = vadd.f32 %v1863, %v1869
        %v1871 = vadd.f32 %v1864, %v1869
        %v1872 = vadd.f32 %v1865, %v1869
        %v1873 = vpack.c.bf16 %v1871, %v1870
        %v1874 = vpack.c.bf16 %v1872, %v1872
        %v1875 = vld [vmem:[%s528] sm:$0xf]
        %v1876 = vld [vmem:[%s528 + $0x4] sm:$0xf]
        %v1877 = vld [vmem:[%s528 + $0x8] sm:$0xf]
        %v1878 = vld [vmem:[%s528 + $0xc] sm:$0xf]
        %v1879 = vld [vmem:[%s531] sm:$0x1]
        %v1881 = vlaneseq
        %v1882 = vshrl.u32 %v1881, 7
        %v1883 = vsub.s32 0, %v1882
        %v1884 = vrot.slane %v1879, %v1883
        %v1890 = vunpack.c.l.b16 %v1875
        %v1891 = vunpack.c.l.b16 %v1876
        %v1892 = vunpack.c.l.b16 %v1877
        %v1893 = vunpack.c.l.b16 %v1878
        %v1894 = vpack.c.b16 %v1891, %v1890
        %v1895 = vpack.c.b16 %v1893, %v1892
        %v1899 = vsel %vm703, %v1873, 0
        %v1902 = vsel %vm703, %v1874, 0
        %1904 = vmatprep.subr.bf16.mxu0 0
        %1905 = vmatpush1.bf16.msra.mxu0 0
        %1906 = vmatprep.subr.bf16.mxu0 0
        %1907 = vmatpush1.bf16.msra.mxu0 0
        %1908 = vmatprep.subr.bf16.mxu0 0
        %1909 = vmatpush1.bf16.msra.mxu0 0
        %1910 = vmatprep.subr.bf16.mxu0 0
        %1911 = vmatpush1.bf16.msra.mxu0 0
        %1912 = vmatprep.subr.bf16.mxu0 0
        %1913 = vmatpush1.bf16.msra.mxu0 0
        %1914 = vmatprep.subr.bf16.mxu0 0
        %1915 = vmatpush1.bf16.msra.mxu0 0
        %1916 = vmatprep.subr.bf16.mxu0 0
        %1917 = vmatpush1.bf16.msra.mxu0 %v1895
        %1918 = vmatprep.subr.bf16.mxu0 0
        %1919 = vmatpush1.bf16.msra.mxu0 %v1894
        %1920 = vmatprep.subr.bf16.mxu0 0
        %1921 = vmatpush2.bf16.msra.mxu0 0
        %1922 = vmatprep.subr.bf16.mxu0 0
        %1923 = vmatpush2.bf16.msra.mxu0 0
        %1924 = vmatprep.subr.bf16.mxu0 0
        %1925 = vmatpush2.bf16.msra.mxu0 0
        %1926 = vmatprep.subr.bf16.mxu0 0
        %1927 = vmatpush2.bf16.msra.mxu0 0
        %1928 = vmatprep.subr.bf16.mxu0 0
        %1929 = vmatpush2.bf16.msra.mxu0 0
        %1930 = vmatprep.subr.bf16.mxu0 0
        %1931 = vmatpush2.bf16.msra.mxu0 0
        %1932 = vmatprep.subr.bf16.mxu0 0
        %1933 = vmatpush2.bf16.msra.mxu0 0
        %1934 = vmatprep.subr.bf16.mxu0 0
        %1935 = vmatpush2.bf16.msra.mxu0 0
        %1936 = vmatprep.mubr.bf16.mxu0 0
        %1937 = vmatmul.mubr.bf16.gmra.mxu0 %v1899
        %v1938 = vpop.f32.mrf.mxu0
        %v1939 = vadd.f32 %v1884, %v1938
        %v1940 = vpop.f32.mrf.mxu0
        %v1941 = vpop.f32.mrf.mxu0
        %v1942 = vadd.f32 %v1884, %v1941
        %v1943 = vpop.f32.mrf.mxu0
        %1944 = vmatprep.mubr.bf16.mxu0 0
        %1945 = vmatmul.mubr.bf16.gmra.mxu0 %v1902
        %v1946 = vpop.f32.mrf.mxu0
        %v1947 = vadd.f32 %v1884, %v1946
        %v1948 = vpop.f32.mrf.mxu0
        %v1949 = vpop.f32.mrf.mxu0
        %v1950 = vpop.f32.mrf.mxu0
        %1951 = vdwg.mxu0
        %v1952 = vmul.f32 %v1939, 0.5
        %v1953 = vmul.f32 %v1942, 0.5
        %v1954 = vmul.f32 %v1947, 0.5
        %v1955 = vmul.f32 %v1939, 0.70710677
        %v1956 = vmul.f32 %v1942, 0.70710677
        %v1957 = vmul.f32 %v1947, 0.70710677
        %v1958 = verf.f32.pop %v1955
        %v1959 = verf.f32.pop %v1956
        %v1960 = verf.f32.pop %v1957
        %v1961 = vadd.f32 %v1958, 1.0
        %v1962 = vadd.f32 %v1959, 1.0
        %v1963 = vadd.f32 %v1960, 1.0
        %v1964 = vmul.f32 %v1952, %v1961
        %v1965 = vmul.f32 %v1953, %v1962
        %v1966 = vmul.f32 %v1954, %v1963
        %v1967 = vpack.c.bf16 %v1965, %v1964
        %v1968 = vpack.c.bf16 %v1966, %v1966
        %v1969 = vld [vmem:[%s536] sm:$0xf]
        %v1970 = vld [vmem:[%s536 + $0x4] sm:$0xf]
        %v1971 = vld [vmem:[%s536 + $0x8] sm:$0xf]
        %v1972 = vld [vmem:[%s536 + $0xc] sm:$0xf]
        %v1973 = vld [vmem:[%s536 + $0x10] sm:$0xf]
        %v1974 = vld [vmem:[%s536 + $0x14] sm:$0xf]
        %v1975 = vld [vmem:[%s536 + $0x18] sm:$0xf]
        %v1976 = vld [vmem:[%s536 + $0x1c] sm:$0xf]
        %v1977 = vld [vmem:[%s536 + $0x20] sm:$0xf]
        %v1978 = vld [vmem:[%s536 + $0x24] sm:$0xf]
        %v1979 = vld [vmem:[%s536 + $0x28] sm:$0xf]
        %v1980 = vld [vmem:[%s536 + $0x2c] sm:$0xf]
        %v1981 = vld [vmem:[%s536 + $0x30] sm:$0xf]
        %v1982 = vld [vmem:[%s536 + $0x34] sm:$0xf]
        %v1983 = vld [vmem:[%s536 + $0x38] sm:$0xf]
        %v1984 = vld [vmem:[%s536 + $0x3c] sm:$0xf]
        %v1985 = vlaneseq
        %v1986 = vshrl.u32 %v1985, 7
        %v1987 = vsub.s32 0, %v1986
        %v1988 = vrot.slane %v702, %v1987
        %v2005 = vunpack.c.l.b16 %v1969
        %v2006 = vunpack.c.l.b16 %v1970
        %v2007 = vunpack.c.l.b16 %v1971
        %v2008 = vunpack.c.l.b16 %v1972
        %v2009 = vunpack.c.l.b16 %v1973
        %v2010 = vunpack.c.l.b16 %v1974
        %v2011 = vunpack.c.l.b16 %v1975
        %v2012 = vunpack.c.l.b16 %v1976
        %v2013 = vunpack.c.l.b16 %v1977
        %v2014 = vunpack.c.l.b16 %v1978
        %v2015 = vunpack.c.l.b16 %v1979
        %v2016 = vunpack.c.l.b16 %v1980
        %v2017 = vunpack.c.l.b16 %v1981
        %v2018 = vunpack.c.l.b16 %v1982
        %v2019 = vunpack.c.l.b16 %v1983
        %v2020 = vunpack.c.l.b16 %v1984
        %v2021 = vpack.c.b16 %v2006, %v2005
        %v2022 = vpack.c.b16 %v2008, %v2007
        %v2023 = vpack.c.b16 %v2010, %v2009
        %v2024 = vpack.c.b16 %v2012, %v2011
        %v2025 = vpack.c.b16 %v2014, %v2013
        %v2026 = vpack.c.b16 %v2016, %v2015
        %v2027 = vpack.c.b16 %v2018, %v2017
        %v2028 = vpack.c.b16 %v2020, %v2019
        %2037 = vmatprep.subr.bf16.mxu0 0
        %2038 = vmatpush1.bf16.msra.mxu0 %v2028
        %2039 = vmatprep.subr.bf16.mxu0 0
        %2040 = vmatpush1.bf16.msra.mxu0 %v2027
        %2041 = vmatprep.subr.bf16.mxu0 0
        %2042 = vmatpush1.bf16.msra.mxu0 %v2026
        %2043 = vmatprep.subr.bf16.mxu0 0
        %2044 = vmatpush1.bf16.msra.mxu0 %v2025
        %2045 = vmatprep.subr.bf16.mxu0 0
        %2046 = vmatpush1.bf16.msra.mxu0 %v2024
        %2047 = vmatprep.subr.bf16.mxu0 0
        %2048 = vmatpush1.bf16.msra.mxu0 %v2023
        %2049 = vmatprep.subr.bf16.mxu0 0
        %2050 = vmatpush1.bf16.msra.mxu0 %v2022
        %2051 = vmatprep.subr.bf16.mxu0 0
        %2052 = vmatpush1.bf16.msra.mxu0 %v2021
        %2053 = vmatprep.subr.bf16.mxu0 0
        %2054 = vmatpush2.bf16.msra.mxu0 0
        %2055 = vmatprep.subr.bf16.mxu0 0
        %2056 = vmatpush2.bf16.msra.mxu0 0
        %2057 = vmatprep.subr.bf16.mxu0 0
        %2058 = vmatpush2.bf16.msra.mxu0 0
        %2059 = vmatprep.subr.bf16.mxu0 0
        %2060 = vmatpush2.bf16.msra.mxu0 0
        %2061 = vmatprep.subr.bf16.mxu0 0
        %2062 = vmatpush2.bf16.msra.mxu0 0
        %2063 = vmatprep.subr.bf16.mxu0 0
        %2064 = vmatpush2.bf16.msra.mxu0 0
        %2065 = vmatprep.subr.bf16.mxu0 0
        %2066 = vmatpush2.bf16.msra.mxu0 0
        %2067 = vmatprep.subr.bf16.mxu0 0
        %2068 = vmatpush2.bf16.msra.mxu0 0
        %2069 = vmatprep.mubr.bf16.mxu0 0
        %2070 = vmatmul.mubr.bf16.gmra.mxu0 %v1967
        %v2071 = vpop.f32.mrf.mxu0
        %v2072 = vadd.f32 %v1988, %v2071
        %v2073 = vpop.f32.mrf.mxu0
        %v2074 = vpop.f32.mrf.mxu0
        %v2075 = vadd.f32 %v1988, %v2074
        %v2076 = vpop.f32.mrf.mxu0
        %2077 = vmatprep.mubr.bf16.mxu0 0
        %2078 = vmatmul.mubr.bf16.gmra.mxu0 %v1968
        %v2079 = vpop.f32.mrf.mxu0
        %v2080 = vadd.f32 %v1988, %v2079
        %v2081 = vpop.f32.mrf.mxu0
        %v2082 = vpop.f32.mrf.mxu0
        %v2083 = vpop.f32.mrf.mxu0
        %2084 = vdwg.mxu0
        %v2085 = vadd.f32 %v1817, %v2072
        %v2086 = vadd.f32 %v1818, %v2075
        %v2087 = vadd.f32 %v1819, %v2080
        %2088 = vst.msk [vmem:[#allocation2] sm:$0xff] %vm703, %v2085
        %2089 = vst.msk [vmem:[#allocation2 + $0x8] sm:$0xff] %vm703, %v2086
        %2090 = vst.msk [vmem:[#allocation2 + $0x10] sm:$0xff] %vm703, %v2087
        %p2091 = scmp.eq.s32.totalorder %s31, 1
        // Predicated region
        $region73: #{tpu_custom_call.1} parent=67 // pred_check
          %p2092 = pneg %p2091
        $region74: #{tpu_custom_call.1} parent=67 // pred_check_branch
          %2094 = sbr.rel (%p2092) target = $region76
        $region75: #{tpu_custom_call.1} parent=67 // pred_region
          %v2095 = vld [vmem:[%s10] sm:$0x1]
          %v2096 = vld [vmem:[%s10 + $0x1] sm:$0x1]
          %vm2097 = vcmask 253952
          %v2098 = vsel %vm2097, %v2085, 0.0
          %2099 = vadd.xlane.f32.xlu0 %v2098
          %v2100 = vpop.xlane.xlu0 %2099
          %v2101 = vmul.f32 %v2100, %v713
          %v2102 = vsub.f32 %v2085, %v2101
          %v2103 = vmul.f32 %v2102, %v2102
          %v2104 = vsel %vm2097, %v2103, 0.0
          %2105 = vadd.xlane.f32.xlu0 %v2104
          %v2106 = vpop.xlane.xlu0 %2105
          %v2107 = vmul.f32 %v2106, %v713
          %v2108 = vadd.f32 %v2107, 1e-05
          %v2109 = vrsqrt.pop %v2108
          %v2110 = vmul.f32 %v2102, %v2109
          %v2111 = vmul.f32 %v2110, %v2095
          %v2112 = vadd.f32 %v2111, %v2096
          %v2113 = vpack.c.bf16 %v2112, %v2112
          %v2114 = vld [vmem:[%s11] sm:$0xf]
          %v2115 = vld [vmem:[%s11 + $0x4] sm:$0xf]
          %v2116 = vld [vmem:[%s11 + $0x8] sm:$0xf]
          %v2117 = vld [vmem:[%s11 + $0xc] sm:$0xf]
          %v2122 = vunpack.c.l.b16 %v2114
          %v2123 = vunpack.c.l.b16 %v2115
          %v2124 = vunpack.c.l.b16 %v2116
          %v2125 = vunpack.c.l.b16 %v2117
          %v2126 = vpack.c.b16 %v2123, %v2122
          %v2127 = vpack.c.b16 %v2125, %v2124
          %v2131 = vsel %vm703, %v2113, 0
          %2133 = vmatprep.subr.bf16.mxu0 0
          %2134 = vmatpush1.bf16.msra.mxu0 0
          %2135 = vmatprep.subr.bf16.mxu0 0
          %2136 = vmatpush1.bf16.msra.mxu0 0
          %2137 = vmatprep.subr.bf16.mxu0 0
          %2138 = vmatpush1.bf16.msra.mxu0 0
          %2139 = vmatprep.subr.bf16.mxu0 0
          %2140 = vmatpush1.bf16.msra.mxu0 0
          %2141 = vmatprep.subr.bf16.mxu0 0
          %2142 = vmatpush1.bf16.msra.mxu0 0
          %2143 = vmatprep.subr.bf16.mxu0 0
          %2144 = vmatpush1.bf16.msra.mxu0 0
          %2145 = vmatprep.subr.bf16.mxu0 0
          %2146 = vmatpush1.bf16.msra.mxu0 %v2127
          %2147 = vmatprep.subr.bf16.mxu0 0
          %2148 = vmatpush1.bf16.msra.mxu0 %v2126
          %2149 = vmatprep.subr.bf16.mxu0 0
          %2150 = vmatpush2.bf16.msra.mxu0 0
          %2151 = vmatprep.subr.bf16.mxu0 0
          %2152 = vmatpush2.bf16.msra.mxu0 0
          %2153 = vmatprep.subr.bf16.mxu0 0
          %2154 = vmatpush2.bf16.msra.mxu0 0
          %2155 = vmatprep.subr.bf16.mxu0 0
          %2156 = vmatpush2.bf16.msra.mxu0 0
          %2157 = vmatprep.subr.bf16.mxu0 0
          %2158 = vmatpush2.bf16.msra.mxu0 0
          %2159 = vmatprep.subr.bf16.mxu0 0
          %2160 = vmatpush2.bf16.msra.mxu0 0
          %2161 = vmatprep.subr.bf16.mxu0 0
          %2162 = vmatpush2.bf16.msra.mxu0 0
          %2163 = vmatprep.subr.bf16.mxu0 0
          %2164 = vmatpush2.bf16.msra.mxu0 0
          %2165 = vmatprep.mubr.bf16.mxu0 0
          %2166 = vmatmul.mubr.bf16.gmra.mxu0 %v2131
          %v2167 = vpop.f32.mrf.mxu0
          %v2168 = vadd.f32 0.0, %v2167
          %v2169 = vpop.f32.mrf.mxu0
          %v2170 = vpop.f32.mrf.mxu0
          %v2171 = vpop.f32.mrf.mxu0
          %2172 = vdwg.mxu0
          %vm2173 = vcmask 122880
          %2174 = vst.msk [vmem:[%s503] sm:$0x1] %vm2173, %v2168
        $region76: #{tpu_custom_call.1} parent=67 // pred_fallthru
          _
        %s2175 = sand.u32 %s333, 1
        %s2176 = scalar_lea.sflag [#allocation4], %s2175
        %s2177 = sand.u32 %s333, 1
        %s2178 = scalar_lea.vmem [#allocation3], %s2177
        // Predicated region
        $region77: #{tpu_custom_call.1} parent=67 // pred_check
          %p2179 = pneg %p343
        $region78: #{tpu_custom_call.1} parent=67 // pred_check_branch
          %2181 = sbr.rel (%p2179) target = $region80
        $region79: #{tpu_custom_call.1} parent=67 // pred_region
          %s2183 = ssub.s32 16, 16
          %2184 = vsyncadd %s2176, %s2183
          %s2185 = smul.addr %s30, 16
          %s2186 = scalar_lea.hbm %s12, %s2185
          %s2188 = sshll.u32 %s2178, 4
          %s2189 = int_to_ptr.vmem [resolvable:$true] %s2188
          %2191 = dma.vmem_to_hbm [thread:$0]  %s2189, 16, %s2186, %s2176
        $region80: #{tpu_custom_call.1} parent=67 // pred_fallthru
          _
      $region68: #{tpu_custom_call.1} parent=5 // pred_fallthru
        _
      %p2192 = scmp.le.s32.totalorder 2, %s21
      // Predicated region
      $region81: #{tpu_custom_call.1} parent=5 // pred_check
        %p2193 = pneg %p2192
      $region82: #{tpu_custom_call.1} parent=5 // pred_check_branch
        %2195 = sbr.rel (%p2193) target = $region84
      $region83: #{tpu_custom_call.1} parent=5 // pred_region
        %s2196 = ssub.s32 %s21, 2
        // Predicated region
        $region85: #{tpu_custom_call.1} parent=83 // pred_check
          %p2197 = pneg %p349
        $region86: #{tpu_custom_call.1} parent=83 // pred_check_branch
          %2199 = sbr.rel (%p2197) target = $region88
        $region87: #{tpu_custom_call.1} parent=83 // pred_region
          %s2200 = sand.u32 %s334, 1
          %s2201 = scalar_lea.sflag [#allocation4], %s2200
          %s2202 = sand.u32 %s334, 1
          %s2203 = scalar_lea.vmem [#allocation3], %s2202
          %2204 = dma.done %s2201, 16
        $region88: #{tpu_custom_call.1} parent=83 // pred_fallthru
          _
      $region84: #{tpu_custom_call.1} parent=5 // pred_fallthru
        _
    $region6: #{tpu_custom_call.1} parent=1 // loop_footer
      %s25 = sadd.s32 1, %s21
    $region7: #{tpu_custom_call.1} parent=1 // loop_footer_branch
      %20 = sbr.rel target = $region3
    $region8: #{tpu_custom_call.1} parent=1 // loop_exit
      _
    %2205 = vsyncpa [#allocation4], 1
    %s2206 = scalar_lea.sflag [#allocation4], 1
    %2207 = vsyncpa %s2206, 1

</llo_original>
